<compile_context>
chip_gen: v6e
topology: v6e:2x2x1
jax: 0.10.0
libtpu: 0.0.40
codegen_flags: <defaults>
</compile_context>

<pallas_src>
import numpy as np
import jax
import jax.numpy as jnp
from jax.experimental import pallas as pl
from jax.experimental.pallas import tpu as pltpu

N_NODES = 8
IN_CH = 256
GGL_OUT = 10
GGL_PAD = 128
C1_OUT = 1200
C1_PAD = 1280          # 1200 padded so it splits into two 640-wide tiles
C1_TILE = 640
C2_OUT = 300
OUT_CH = 256
EPS = 1e-5


# ----------------------------- kernel helpers ------------------------------

def _graph_propagator(x, wg, bg):
    """GGL + Gen_edge + ChebConv normalization -> dense propagation operator.

    Returns L_hat (N, N) = -D^{-1/2} W^T D^{-1/2} with zero diagonal, where
    W = (atrr atrr^T) / colmax with the diagonal removed.
    """
    z = jnp.dot(x, wg.astype(jnp.float32), preferred_element_type=jnp.float32) + bg
    atrr = 1.0 / (1.0 + jnp.exp(-z))                      # sigmoid
    lane = jax.lax.broadcasted_iota(jnp.int32, z.shape, 1)
    atrr = jnp.where(lane < GGL_OUT, atrr, 0.0)           # mask padded GGL lanes
    a = jax.lax.dot_general(atrr, atrr, (((1,), (1,)), ((), ())),
                            preferred_element_type=jnp.float32)      # (N, N)
    a_norm = a / jnp.max(a, axis=0, keepdims=True)        # col max == row max (sym.)
    n = a.shape[0]
    rows = jax.lax.broadcasted_iota(jnp.int32, (n, n), 0)
    cols = jax.lax.broadcasted_iota(jnp.int32, (n, n), 1)
    w = jnp.where(rows == cols, 0.0, a_norm)              # remove self loops
    deg = jnp.sum(w, axis=1, keepdims=True)
    dinv = jnp.where(deg > 0.0, jax.lax.rsqrt(deg), 0.0)
    s = dinv * w * jnp.transpose(dinv)
    return -jnp.transpose(s)


# ------------------------------ Pallas kernels ------------------------------

def _c1_kernel(x_ref, wg_ref, bg_ref, w1_ref, b1_ref, g1_ref, be1_ref,
               x1_ref, t_ref):
    """Graph op + MultiChev (stacked K=1,2,3 matmul) + BatchNorm(1200).

    Grid tiles the (padded) 1280 output features; the tiny graph/T recompute
    per tile keeps the grid embarrassingly parallel (v7x megacore)."""
    x = x_ref[...]                                         # (N, 256) f32
    lmat = _graph_propagator(x, wg_ref[...], bg_ref[...])  # (N, N)
    t1 = jnp.dot(lmat, x, preferred_element_type=jnp.float32)
    t2 = 2.0 * jnp.dot(lmat, t1, preferred_element_type=jnp.float32) - x
    c = x.shape[1]
    t_ref[:, 0:c] = x
    t_ref[:, c:2 * c] = t1
    t_ref[:, 2 * c:3 * c] = t2
    y = jnp.dot(t_ref[...], w1_ref[...].astype(jnp.float32),
                preferred_element_type=jnp.float32) + b1_ref[...]
    mean = jnp.mean(y, axis=0, keepdims=True)
    var = jnp.mean((y - mean) ** 2, axis=0, keepdims=True)
    x1_ref[...] = (y - mean) * jax.lax.rsqrt(var + EPS) * g1_ref[...] + be1_ref[...]


def _c2_out_kernel(x_ref, wg_ref, bg_ref, x1_ref, w2_ref, b2_ref, g2_ref,
                   be2_ref, w5_ref, b5_ref, out_ref, t_ref):
    """MultiChev_B + BatchNorm(300) + Linear(300,256) + ReLU, fused.

    lmat is recomputed from x/Wg (sub-microsecond) to avoid exporting it."""
    x = x_ref[...]
    lmat = _graph_propagator(x, wg_ref[...], bg_ref[...])
    x1 = x1_ref[...]                                       # (N, 1280) f32
    t1 = jnp.dot(lmat, x1, preferred_element_type=jnp.float32)
    t2 = 2.0 * jnp.dot(lmat, t1, preferred_element_type=jnp.float32) - x1
    c = x1.shape[1]
    t_ref[:, 0:c] = x1
    t_ref[:, c:2 * c] = t1
    t_ref[:, 2 * c:3 * c] = t2
    y = jnp.dot(t_ref[...], w2_ref[...].astype(jnp.float32),
                preferred_element_type=jnp.float32) + b2_ref[...]
    mean = jnp.mean(y, axis=0, keepdims=True)
    var = jnp.mean((y - mean) ** 2, axis=0, keepdims=True)
    x2 = (y - mean) * jax.lax.rsqrt(var + EPS) * g2_ref[...] + be2_ref[...]
    z = jnp.dot(x2, w5_ref[...].astype(jnp.float32),
                preferred_element_type=jnp.float32) + b5_ref[...]
    out_ref[...] = jnp.maximum(z, 0.0)


# -------------------------------- forward -----------------------------------

def mgcn_forward(x, p):
    n = x.shape[0]

    x1 = pl.pallas_call(
        _c1_kernel,
        out_shape=jax.ShapeDtypeStruct((n, C1_PAD), jnp.float32),
        grid=(C1_PAD // C1_TILE,),
        in_specs=[
            pl.BlockSpec((n, IN_CH), lambda j: (0, 0)),
            pl.BlockSpec((IN_CH, GGL_PAD), lambda j: (0, 0)),
            pl.BlockSpec((1, GGL_PAD), lambda j: (0, 0)),
            pl.BlockSpec((3 * IN_CH, C1_TILE), lambda j: (0, j)),
            pl.BlockSpec((1, C1_TILE), lambda j: (0, j)),
            pl.BlockSpec((1, C1_TILE), lambda j: (0, j)),
            pl.BlockSpec((1, C1_TILE), lambda j: (0, j)),
        ],
        out_specs=pl.BlockSpec((n, C1_TILE), lambda j: (0, j)),
        scratch_shapes=[pltpu.VMEM((n, 3 * IN_CH), jnp.float32)],
        compiler_params=pltpu.CompilerParams(
            dimension_semantics=("parallel",)),
    )(x, p["wg"], p["bg"], p["w1"], p["b1"], p["g1"], p["be1"])

    out = pl.pallas_call(
        _c2_out_kernel,
        out_shape=jax.ShapeDtypeStruct((n, OUT_CH), jnp.float32),
        grid=(1,),
        in_specs=[
            pl.BlockSpec((n, IN_CH), lambda i: (0, 0)),
            pl.BlockSpec((IN_CH, GGL_PAD), lambda i: (0, 0)),
            pl.BlockSpec((1, GGL_PAD), lambda i: (0, 0)),
            pl.BlockSpec((n, C1_PAD), lambda i: (0, 0)),
            pl.BlockSpec((3 * C1_PAD, C2_OUT), lambda i: (0, 0)),
            pl.BlockSpec((1, C2_OUT), lambda i: (0, 0)),
            pl.BlockSpec((1, C2_OUT), lambda i: (0, 0)),
            pl.BlockSpec((1, C2_OUT), lambda i: (0, 0)),
            pl.BlockSpec((C2_OUT, OUT_CH), lambda i: (0, 0)),
            pl.BlockSpec((1, OUT_CH), lambda i: (0, 0)),
        ],
        out_specs=pl.BlockSpec((n, OUT_CH), lambda i: (0, 0)),
        scratch_shapes=[pltpu.VMEM((n, 3 * C1_PAD), jnp.float32)],
        compiler_params=pltpu.CompilerParams(
            dimension_semantics=("arbitrary",)),
    )(x, p["wg"], p["bg"], x1, p["w2"], p["b2"], p["g2"], p["be2"],
      p["w5"], p["b5"])
    return out


# ------------------------------- parameters ---------------------------------

def _pad_to(a, rows=None, cols=None):
    r = a.shape[0] if rows is None else rows
    c = a.shape[1] if cols is None else cols
    return jnp.pad(a, ((0, r - a.shape[0]), (0, c - a.shape[1])))


def init_params(key):
    """All padding / Chebyshev stacking / bf16 casting happens ONCE here."""
    s = 0.05
    ks = jax.random.split(key, 8)

    def cheb_weights(block_key, cin, cout_each):
        kk = jax.random.split(block_key, 9)
        w = [s * jax.random.normal(kk[i], (cin, cout_each), jnp.float32) for i in range(6)]
        b = [s * jax.random.normal(kk[6 + i], (cout_each,), jnp.float32) for i in range(3)]
        w10, w20, w21, w30, w31, w32 = w
        z = jnp.zeros((cin, cout_each), jnp.float32)
        wa = jnp.concatenate([w10, w20, w30], axis=1)   # multiplies T0 = x
        wb = jnp.concatenate([z, w21, w31], axis=1)     # multiplies T1 = L x
        wc = jnp.concatenate([z, z, w32], axis=1)       # multiplies T2 = 2 L T1 - x
        bias = jnp.concatenate(b)[None, :]
        return wa, wb, wc, bias

    p = {}
    # GGL: nn.Linear(256, 10) stored (in, out), lane-padded 10 -> 128.
    wg = s * jax.random.normal(ks[0], (IN_CH, GGL_OUT), jnp.float32)
    bg = s * jax.random.normal(ks[1], (1, GGL_OUT), jnp.float32)
    p["wg"] = _pad_to(wg, cols=GGL_PAD).astype(jnp.bfloat16)
    p["bg"] = _pad_to(bg, cols=GGL_PAD)

    # MultiChev (3 x ChebConv -> 1200): stacked over [T0; T1; T2], padded to 1280.
    wa, wb, wc, b1 = cheb_weights(ks[2], IN_CH, 400)
    w1 = jnp.concatenate([wa, wb, wc], axis=0)                     # (768, 1200)
    p["w1"] = _pad_to(w1, cols=C1_PAD).astype(jnp.bfloat16)        # (768, 1280)
    p["b1"] = _pad_to(b1, cols=C1_PAD)
    p["g1"] = _pad_to(jnp.ones((1, C1_OUT), jnp.float32), cols=C1_PAD)  # pad = 0
    p["be1"] = jnp.zeros((1, C1_PAD), jnp.float32)

    # MultiChev_B (3 x ChebConv -> 300): row blocks padded 1200 -> 1280, stacked.
    wa, wb, wc, b2 = cheb_weights(ks[3], C1_OUT, 100)
    w2 = jnp.concatenate([_pad_to(wa, rows=C1_PAD),
                          _pad_to(wb, rows=C1_PAD),
                          _pad_to(wc, rows=C1_PAD)], axis=0)       # (3840, 300)
    p["w2"] = w2.astype(jnp.bfloat16)
    p["b2"] = b2
    p["g2"] = jnp.ones((1, C2_OUT), jnp.float32)
    p["be2"] = jnp.zeros((1, C2_OUT), jnp.float32)

    # layer5: nn.Linear(300, 256) stored pre-transposed.
    p["w5"] = (s * jax.random.normal(ks[4], (C2_OUT, OUT_CH), jnp.float32)
               ).astype(jnp.bfloat16)
    p["b5"] = s * jax.random.normal(ks[5], (1, OUT_CH), jnp.float32)
    return p


# ------------------------------- reference ----------------------------------

def mgcn_reference(x, p):
    """Pure-JAX reference (uses the same bf16-quantized weights, f32 math)."""
    hp = jax.lax.Precision.HIGHEST
    wg = p["wg"].astype(jnp.float32)[:, :GGL_OUT]
    bg = p["bg"][:, :GGL_OUT]
    atrr = jax.nn.sigmoid(jnp.dot(x, wg, precision=hp) + bg)
    a = jnp.dot(atrr, atrr.T, precision=hp)
    a_norm = a / jnp.max(a, axis=0, keepdims=True)
    n = a.shape[0]
    w = a_norm * (1.0 - jnp.eye(n, dtype=jnp.float32))
    deg = w.sum(axis=1)
    dinv = jnp.where(deg > 0, deg ** -0.5, 0.0)
    lmat = -(dinv[:, None] * w * dinv[None, :]).T

    def cheb_bn(xin, wa, wb, wc, bias, g, be):
        t1 = jnp.dot(lmat, xin, precision=hp)
        t2 = 2.0 * jnp.dot(lmat, t1, precision=hp) - xin
        y = (jnp.dot(xin, wa, precision=hp) + jnp.dot(t1, wb, precision=hp)
             + jnp.dot(t2, wc, precision=hp) + bias)
        mean = y.mean(0, keepdims=True)
        var = ((y - mean) ** 2).mean(0, keepdims=True)
        return (y - mean) / jnp.sqrt(var + EPS) * g + be

    w1f = p["w1"].astype(jnp.float32)[:, :C1_OUT]
    x1 = cheb_bn(x, w1f[0:IN_CH], w1f[IN_CH:2 * IN_CH], w1f[2 * IN_CH:3 * IN_CH],
                 p["b1"][:, :C1_OUT], p["g1"][:, :C1_OUT], p["be1"][:, :C1_OUT])

    w2f = p["w2"].astype(jnp.float32)
    x2 = cheb_bn(x1, w2f[0:C1_OUT],
                 w2f[C1_PAD:C1_PAD + C1_OUT],
                 w2f[2 * C1_PAD:2 * C1_PAD + C1_OUT],
                 p["b2"], p["g2"], p["be2"])

    w5f = p["w5"].astype(jnp.float32)
    return jnp.maximum(jnp.dot(x2, w5f, precision=hp) + p["b5"], 0.0)


# --------------------------------- main --------------------------------------

if __name__ == "__main__":
    key = jax.random.PRNGKey(0)
    kx, kp = jax.random.split(key)
    x = jax.random.normal(kx, (N_NODES, IN_CH), jnp.float32)
    params = init_params(kp)

    out = jax.block_until_ready(mgcn_forward(x, params))
    assert out.shape == (N_NODES, OUT_CH) and out.dtype == jnp.float32

    ref = mgcn_reference(x, params)
    np.testing.assert_allclose(np.asarray(out), np.asarray(ref), atol=5e-2, rtol=5e-2)
    print("KERNEL_OK")
</pallas_src>

<mosaic_0001>
module attributes {stable_mosaic.version = 11 : i64} {
  func.func @_c1_kernel(%arg0: i32, %arg1: memref<8x256xf32, #tpu.memory_space<vmem>>, %arg2: memref<256x128xbf16, #tpu.memory_space<vmem>>, %arg3: memref<1x128xf32, #tpu.memory_space<vmem>>, %arg4: memref<768x640xbf16, #tpu.memory_space<vmem>>, %arg5: memref<1x640xf32, #tpu.memory_space<vmem>>, %arg6: memref<1x640xf32, #tpu.memory_space<vmem>>, %arg7: memref<1x640xf32, #tpu.memory_space<vmem>>, %arg8: memref<8x640xf32, #tpu.memory_space<vmem>>, %arg9: memref<8x768xf32, #tpu.memory_space<vmem>>) attributes {dimension_semantics = [#tpu.dimension_semantics<parallel>], iteration_bounds = array<i64: 2>, scalar_prefetch = 0 : i64, scratch_operands = 1 : i64, tpu.core_type = #tpu.core_type<tc>, window_params = [{pipeline_mode = #tpu.pipeline_mode<synchronous>, transform_indices = @transform_0, window_bounds = array<i64: 8, 256>}, {pipeline_mode = #tpu.pipeline_mode<synchronous>, transform_indices = @transform_1, window_bounds = array<i64: 256, 128>}, {pipeline_mode = #tpu.pipeline_mode<synchronous>, transform_indices = @transform_2, window_bounds = array<i64: 1, 128>}, {transform_indices = @transform_3, window_bounds = array<i64: 768, 640>}, {transform_indices = @transform_4, window_bounds = array<i64: 1, 640>}, {transform_indices = @transform_5, window_bounds = array<i64: 1, 640>}, {transform_indices = @transform_6, window_bounds = array<i64: 1, 640>}, {transform_indices = @transform_7, window_bounds = array<i64: 8, 640>}]} {
    %c0 = arith.constant 0 : index
    %c0_0 = arith.constant 0 : index
    %0 = vector.load %arg1[%c0, %c0_0] : memref<8x256xf32, #tpu.memory_space<vmem>>, vector<8x256xf32>
    %c0_1 = arith.constant 0 : index
    %c0_2 = arith.constant 0 : index
    %1 = vector.load %arg2[%c0_1, %c0_2] : memref<256x128xbf16, #tpu.memory_space<vmem>>, vector<256x128xbf16>
    %c0_3 = arith.constant 0 : index
    %c0_4 = arith.constant 0 : index
    %2 = vector.load %arg3[%c0_3, %c0_4] : memref<1x128xf32, #tpu.memory_space<vmem>>, vector<1x128xf32>
    %3 = arith.extf %1 : vector<256x128xbf16> to vector<256x128xf32>
    %cst = arith.constant dense<0.000000e+00> : vector<8x128xf32>
    %4 = tpu.matmul %0, %3, %cst {dimension_numbers = #tpu.dot_dimension_numbers<[1], [0], [0], [1], [0, 0, 1, 1], [], []>} : vector<8x256xf32>, vector<256x128xf32>, vector<8x128xf32> -> vector<8x128xf32>
    %5 = vector.broadcast %2 : vector<1x128xf32> to vector<8x128xf32>
    %6 = arith.addf %4, %5 : vector<8x128xf32>
    %cst_5 = arith.constant 0.000000e+00 : f32
    %7 = vector.broadcast %cst_5 : f32 to vector<8x128xf32>
    %8 = arith.subf %7, %6 : vector<8x128xf32>
    %9 = math.exp %8 : vector<8x128xf32>
    %cst_6 = arith.constant 1.000000e+00 : f32
    %10 = vector.broadcast %cst_6 : f32 to vector<8x128xf32>
    %11 = arith.addf %10, %9 : vector<8x128xf32>
    %cst_7 = arith.constant 1.000000e+00 : f32
    %12 = vector.broadcast %cst_7 : f32 to vector<8x128xf32>
    %13 = arith.divf %12, %11 : vector<8x128xf32>
    %14 = tpu.iota {dimensions = array<i32: 1>} : vector<8x128xi32>
    %c10_i32 = arith.constant 10 : i32
    %15 = vector.broadcast %c10_i32 : i32 to vector<8x128xi32>
    %16 = arith.cmpi slt, %14, %15 : vector<8x128xi32>
    %cst_8 = arith.constant 0.000000e+00 : f32
    %17 = vector.broadcast %cst_8 : f32 to vector<8x128xf32>
    %18 = arith.select %16, %13, %17 : vector<8x128xi1>, vector<8x128xf32>
    %cst_9 = arith.constant dense<0.000000e+00> : vector<8x8xf32>
    %19 = tpu.matmul %18, %18, %cst_9 {dimension_numbers = #tpu.dot_dimension_numbers<[1], [1], [0], [0], [0, 0, 1, 0], [], []>} : vector<8x128xf32>, vector<8x128xf32>, vector<8x8xf32> -> vector<8x8xf32>
    %cst_10 = arith.constant dense<0xFF800000> : vector<8xf32>
    %20 = vector.multi_reduction <maximumf>, %19, %cst_10 [0] : vector<8x8xf32> to vector<8xf32>
    %21 = vector.shape_cast %20 : vector<8xf32> to vector<1x8xf32>
    %22 = vector.broadcast %21 : vector<1x8xf32> to vector<8x8xf32>
    %23 = arith.divf %19, %22 : vector<8x8xf32>
    %24 = tpu.iota {dimensions = array<i32: 0>} : vector<8x8xi32>
    %25 = tpu.iota {dimensions = array<i32: 1>} : vector<8x8xi32>
    %26 = arith.cmpi eq, %24, %25 : vector<8x8xi32>
    %cst_11 = arith.constant 0.000000e+00 : f32
    %27 = vector.broadcast %cst_11 : f32 to vector<8x8xf32>
    %28 = arith.select %26, %27, %23 : vector<8x8xi1>, vector<8x8xf32>
    %cst_12 = arith.constant dense<0.000000e+00> : vector<8xf32>
    %29 = vector.multi_reduction <add>, %28, %cst_12 [1] : vector<8x8xf32> to vector<8xf32>
    %30 = vector.shape_cast %29 : vector<8xf32> to vector<8x1xf32>
    %cst_13 = arith.constant 0.000000e+00 : f32
    %31 = vector.broadcast %cst_13 : f32 to vector<8x1xf32>
    %32 = arith.cmpf ogt, %30, %31 : vector<8x1xf32>
    %33 = math.rsqrt %30 : vector<8x1xf32>
    %cst_14 = arith.constant 0.000000e+00 : f32
    %34 = vector.broadcast %cst_14 : f32 to vector<8x1xf32>
    %35 = arith.select %32, %33, %34 : vector<8x1xi1>, vector<8x1xf32>
    %36 = vector.broadcast %35 : vector<8x1xf32> to vector<8x8xf32>
    %37 = arith.mulf %36, %28 : vector<8x8xf32>
    %38 = tpu.transpose %35, [1, 0] : vector<8x1xf32> -> vector<1x8xf32>
    %39 = vector.broadcast %38 : vector<1x8xf32> to vector<8x8xf32>
    %40 = arith.mulf %37, %39 : vector<8x8xf32>
    %41 = tpu.transpose %40, [1, 0] : vector<8x8xf32> -> vector<8x8xf32>
    %cst_15 = arith.constant 0.000000e+00 : f32
    %42 = vector.broadcast %cst_15 : f32 to vector<8x8xf32>
    %43 = arith.subf %42, %41 : vector<8x8xf32>
    %cst_16 = arith.constant dense<0.000000e+00> : vector<8x256xf32>
    %44 = tpu.matmul %43, %0, %cst_16 {dimension_numbers = #tpu.dot_dimension_numbers<[1], [0], [0], [1], [0, 0, 1, 1], [], []>} : vector<8x8xf32>, vector<8x256xf32>, vector<8x256xf32> -> vector<8x256xf32>
    %cst_17 = arith.constant dense<0.000000e+00> : vector<8x256xf32>
    %45 = tpu.matmul %43, %44, %cst_17 {dimension_numbers = #tpu.dot_dimension_numbers<[1], [0], [0], [1], [0, 0, 1, 1], [], []>} : vector<8x8xf32>, vector<8x256xf32>, vector<8x256xf32> -> vector<8x256xf32>
    %cst_18 = arith.constant 2.000000e+00 : f32
    %46 = vector.broadcast %cst_18 : f32 to vector<8x256xf32>
    %47 = arith.mulf %46, %45 : vector<8x256xf32>
    %48 = arith.subf %47, %0 : vector<8x256xf32>
    %c0_19 = arith.constant 0 : index
    %c0_20 = arith.constant 0 : index
    %49 = vector.load %arg9[%c0_19, %c0_20] : memref<8x768xf32, #tpu.memory_space<vmem>>, vector<8x256xf32>
    tpu.vector_store %arg9[%c0_19, %c0_20], %0 {strides = array<i32>} : memref<8x768xf32, #tpu.memory_space<vmem>>, vector<8x256xf32>,
    %c0_21 = arith.constant 0 : index
    %c256 = arith.constant 256 : index
    %50 = vector.load %arg9[%c0_21, %c256] : memref<8x768xf32, #tpu.memory_space<vmem>>, vector<8x256xf32>
    tpu.vector_store %arg9[%c0_21, %c256], %44 {strides = array<i32>} : memref<8x768xf32, #tpu.memory_space<vmem>>, vector<8x256xf32>,
    %c0_22 = arith.constant 0 : index
    %c512 = arith.constant 512 : index
    %51 = vector.load %arg9[%c0_22, %c512] : memref<8x768xf32, #tpu.memory_space<vmem>>, vector<8x256xf32>
    tpu.vector_store %arg9[%c0_22, %c512], %48 {strides = array<i32>} : memref<8x768xf32, #tpu.memory_space<vmem>>, vector<8x256xf32>,
    %c0_23 = arith.constant 0 : index
    %c0_24 = arith.constant 0 : index
    %52 = vector.load %arg9[%c0_23, %c0_24] : memref<8x768xf32, #tpu.memory_space<vmem>>, vector<8x768xf32>
    %c0_25 = arith.constant 0 : index
    %c0_26 = arith.constant 0 : index
    %53 = vector.load %arg4[%c0_25, %c0_26] : memref<768x640xbf16, #tpu.memory_space<vmem>>, vector<768x640xbf16>
    %54 = arith.extf %53 : vector<768x640xbf16> to vector<768x640xf32>
    %cst_27 = arith.constant dense<0.000000e+00> : vector<8x640xf32>
    %55 = tpu.matmul %52, %54, %cst_27 {dimension_numbers = #tpu.dot_dimension_numbers<[1], [0], [0], [1], [0, 0, 1, 1], [], []>} : vector<8x768xf32>, vector<768x640xf32>, vector<8x640xf32> -> vector<8x640xf32>
    %c0_28 = arith.constant 0 : index
    %c0_29 = arith.constant 0 : index
    %56 = vector.load %arg5[%c0_28, %c0_29] : memref<1x640xf32, #tpu.memory_space<vmem>>, vector<1x640xf32>
    %57 = vector.broadcast %56 : vector<1x640xf32> to vector<8x640xf32>
    %58 = arith.addf %55, %57 : vector<8x640xf32>
    %cst_30 = arith.constant dense<0.000000e+00> : vector<640xf32>
    %59 = vector.multi_reduction <add>, %58, %cst_30 [0] : vector<8x640xf32> to vector<640xf32>
    %60 = vector.shape_cast %59 : vector<640xf32> to vector<1x640xf32>
    %cst_31 = arith.constant 8.000000e+00 : f32
    %61 = vector.broadcast %cst_31 : f32 to vector<1x640xf32>
    %62 = arith.divf %60, %61 : vector<1x640xf32>
    %63 = vector.broadcast %62 : vector<1x640xf32> to vector<8x640xf32>
    %64 = arith.subf %58, %63 : vector<8x640xf32>
    %65 = arith.mulf %64, %64 : vector<8x640xf32>
    %cst_32 = arith.constant dense<0.000000e+00> : vector<640xf32>
    %66 = vector.multi_reduction <add>, %65, %cst_32 [0] : vector<8x640xf32> to vector<640xf32>
    %67 = vector.shape_cast %66 : vector<640xf32> to vector<1x640xf32>
    %cst_33 = arith.constant 8.000000e+00 : f32
    %68 = vector.broadcast %cst_33 : f32 to vector<1x640xf32>
    %69 = arith.divf %67, %68 : vector<1x640xf32>
    %70 = vector.broadcast %62 : vector<1x640xf32> to vector<8x640xf32>
    %71 = arith.subf %58, %70 : vector<8x640xf32>
    %cst_34 = arith.constant 9.99999974E-6 : f32
    %72 = vector.broadcast %cst_34 : f32 to vector<1x640xf32>
    %73 = arith.addf %69, %72 : vector<1x640xf32>
    %74 = math.rsqrt %73 : vector<1x640xf32>
    %75 = vector.broadcast %74 : vector<1x640xf32> to vector<8x640xf32>
    %76 = arith.mulf %71, %75 : vector<8x640xf32>
    %c0_35 = arith.constant 0 : index
    %c0_36 = arith.constant 0 : index
    %77 = vector.load %arg6[%c0_35, %c0_36] : memref<1x640xf32, #tpu.memory_space<vmem>>, vector<1x640xf32>
    %78 = vector.broadcast %77 : vector<1x640xf32> to vector<8x640xf32>
    %79 = arith.mulf %76, %78 : vector<8x640xf32>
    %c0_37 = arith.constant 0 : index
    %c0_38 = arith.constant 0 : index
    %80 = vector.load %arg7[%c0_37, %c0_38] : memref<1x640xf32, #tpu.memory_space<vmem>>, vector<1x640xf32>
    %81 = vector.broadcast %80 : vector<1x640xf32> to vector<8x640xf32>
    %82 = arith.addf %79, %81 : vector<8x640xf32>
    %c0_39 = arith.constant 0 : index
    %c0_40 = arith.constant 0 : index
    %83 = vector.load %arg8[%c0_39, %c0_40] : memref<8x640xf32, #tpu.memory_space<vmem>>, vector<8x640xf32>
    tpu.vector_store %arg8[%c0_39, %c0_40], %82 {strides = array<i32>} : memref<8x640xf32, #tpu.memory_space<vmem>>, vector<8x640xf32>,
    return
  }
  func.func @transform_0(%arg0: i32) -> (i32, i32) {
    %c0_i32 = arith.constant 0 : i32
    %c0_i32_0 = arith.constant 0 : i32
    %c0_i32_1 = arith.constant 0 : i32
    return %c0_i32, %c0_i32_0 : i32, i32
  }
  func.func @transform_1(%arg0: i32) -> (i32, i32) {
    %c0_i32 = arith.constant 0 : i32
    %c0_i32_0 = arith.constant 0 : i32
    %c0_i32_1 = arith.constant 0 : i32
    return %c0_i32, %c0_i32_0 : i32, i32
  }
  func.func @transform_2(%arg0: i32) -> (i32, i32) {
    %c0_i32 = arith.constant 0 : i32
    %c0_i32_0 = arith.constant 0 : i32
    %c0_i32_1 = arith.constant 0 : i32
    return %c0_i32, %c0_i32_0 : i32, i32
  }
  func.func @transform_3(%arg0: i32) -> (i32, i32) {
    %c0_i32 = arith.constant 0 : i32
    %c0_i32_0 = arith.constant 0 : i32
    return %c0_i32, %arg0 : i32, i32
  }
  func.func @transform_4(%arg0: i32) -> (i32, i32) {
    %c0_i32 = arith.constant 0 : i32
    %c0_i32_0 = arith.constant 0 : i32
    return %c0_i32, %arg0 : i32, i32
  }
  func.func @transform_5(%arg0: i32) -> (i32, i32) {
    %c0_i32 = arith.constant 0 : i32
    %c0_i32_0 = arith.constant 0 : i32
    return %c0_i32, %arg0 : i32, i32
  }
  func.func @transform_6(%arg0: i32) -> (i32, i32) {
    %c0_i32 = arith.constant 0 : i32
    %c0_i32_0 = arith.constant 0 : i32
    return %c0_i32, %arg0 : i32, i32
  }
  func.func @transform_7(%arg0: i32) -> (i32, i32) {
    %c0_i32 = arith.constant 0 : i32
    %c0_i32_0 = arith.constant 0 : i32
    return %c0_i32, %arg0 : i32, i32
  }
}

</mosaic_0001>

<llo_original>
// kernel: tpu_custom_call.1
$region0: #{tpu_custom_call.1}
  #allocation0 [shape = 'u32[]', space=smem, size = 0x4, offset = 0x4, fixed_abs, tag = 'smem constant byte address 0x4 - core index']
  #allocation1 [shape = 'u32[144,128]{1,0:T(1,128)}', space=vmem, size = 0x12000, scoped, tag = 'internal scratch']
  #allocation2 [shape = 'f32[8,768]{1,0:T(8,128)}', space=vmem, size = 0x6000, scoped, tag = 'scratch operand']
  %s0 = inlined_call_operand.hbm [shape: f32[8,256], index: 0, kind: input, shape index: {}]
  %s1 = inlined_call_operand.hbm [shape: bf16[256,128], index: 1, kind: input, shape index: {}]
  %s2 = inlined_call_operand.hbm [shape: f32[1,128], index: 2, kind: input, shape index: {}]
  %s3 = inlined_call_operand.hbm [shape: bf16[768,1280], index: 3, kind: input, shape index: {}]
  %s4 = inlined_call_operand.hbm [shape: f32[1,1280], index: 4, kind: input, shape index: {}]
  %s5 = inlined_call_operand.hbm [shape: f32[1,1280], index: 5, kind: input, shape index: {}]
  %s6 = inlined_call_operand.hbm [shape: f32[1,1280], index: 6, kind: input, shape index: {}]
  %s7 = inlined_call_operand.hbm [shape: f32[8,1280], index: 7, kind: output, shape index: {}]
  %s8 = sld [smem:[#allocation0]]
  $region89: #{tpu_custom_call.1} parent=0
    _
  %s10 = ssub.s32 1, %s8
  %s11 = scalar_select 0, %s10, %s8
  $region1: #{tpu_custom_call.1} parent=0
    #allocation3 [shape = 'u8[8192]{0}', space=vmem, size = 0x2000, scoped, tag = 'input window, operand 0, single buffered']
    #allocation4 [shape = 's32[2]{0}', space=sflag, size = 0x8, scoped, tag = 'scoped memory for tpu_custom_call.1']
    #allocation5 [shape = 's32[2]{0}', space=sflag, size = 0x8, scoped, tag = 'scoped memory for tpu_custom_call.1']
    #allocation6 [shape = 'u8[65536]{0}', space=vmem, size = 0x10000, scoped, tag = 'input window, operand 1, single buffered']
    #allocation7 [shape = 's32[1]{0}', space=sflag, size = 0x4, scoped, tag = 'scoped memory for tpu_custom_call.1']
    #allocation8 [shape = 'u8[512]{0}', space=vmem, size = 0x400, scoped, tag = 'input window, operand 2, single buffered']
    #allocation9 [shape = 'u8[1966080]{0}', space=vmem, size = 0x1e0000, scoped, tag = 'input window, operand 3']
    #allocation10 [shape = 's32[2]{0}', space=sflag, size = 0x8, scoped, tag = 'scoped memory for tpu_custom_call.1']
    #allocation11 [shape = 'u8[5120]{0}', space=vmem, size = 0x1400, scoped, tag = 'input window, operand 4']
    #allocation12 [shape = 'u8[5120]{0}', space=vmem, size = 0x1400, scoped, tag = 'input window, operand 5']
    #allocation13 [shape = 's32[2]{0}', space=sflag, size = 0x8, scoped, tag = 'scoped memory for tpu_custom_call.1']
    #allocation14 [shape = 'u8[5120]{0}', space=vmem, size = 0x1400, scoped, tag = 'input window, operand 6']
    #allocation15 [shape = 'u8[40960]{0}', space=vmem, size = 0xa000, scoped, tag = 'output window, operand 0']
    %12 = vsyncpa [#allocation4], 0
    %13 = vsyncpa [#allocation7], 0
    %14 = vsyncpa [#allocation10], 0
    %s15 = scalar_lea.sflag [#allocation10], 1
    %16 = vsyncpa %s15, 0
    %17 = vsyncpa [#allocation13], 0
    %s18 = scalar_lea.sflag [#allocation13], 1
    %19 = vsyncpa %s18, 0
    %20 = vsyncpa [#allocation5], 0
    %s21 = scalar_lea.sflag [#allocation5], 1
    %22 = vsyncpa %s21, 0
    loop: start=0, step=1, limit=4
    $region2: #{tpu_custom_call.1} parent=1 // loop_pre_header
      _
    $region3: #{tpu_custom_call.1} parent=1 // loop_header
      %s24 = sphi 0, %s28
      %p25 = scmp.ge.s32.totalorder %s24, 4
      %s32 = sphi 0, %s32
      %s34 = sphi 0, %s32
      %s35 = sphi 0, %s34
      %s49 = sphi 0, %s35
      %s53 = sphi 0, %s53
      %s55 = sphi 0, %s53
      %s56 = sphi 0, %s55
      %s70 = sphi 0, %s56
      %s74 = sphi 0, %s74
      %s76 = sphi 0, %s74
      %s77 = sphi 0, %s76
      %s91 = sphi 0, %s77
      %s97 = sphi 0, %s99
      %s100 = sphi 0, %s97
      %s101 = sphi 0, %s100
      %s117 = sphi 0, %s101
      %s123 = sphi 0, %s125
      %s126 = sphi 0, %s123
      %s127 = sphi 0, %s126
      %s143 = sphi 0, %s127
      %s149 = sphi 0, %s151
      %s152 = sphi 0, %s149
      %s153 = sphi 0, %s152
      %s169 = sphi 0, %s153
      %s175 = sphi 0, %s177
      %s178 = sphi 0, %s175
      %s179 = sphi 0, %s178
      %s195 = sphi 0, %s179
      %s201 = sphi 0, %s203
      %s204 = sphi 0, %s201
      %s205 = sphi 0, %s204
      %s221 = sphi 0, %s205
    $region4: #{tpu_custom_call.1} parent=1 // loop_header_branch
      %27 = sbr.rel (%p25) target = $region8
    $region5: #{tpu_custom_call.1} parent=1 // loop_body
      %s29 = ssub.s32 %s24, 1
      %s30 = ssub.s32 %s24, 2
      %s31 = sadd.s32 %s24, 1
      %s33 = sadd.s32 %s32, 1
      %p36 = scmp.eq.s32.totalorder %s24, 1
      %p37 = scmp.ne.s32.totalorder %s32, %s34
      %p38 = scmp.eq.s32.totalorder %s24, 0
      %p39 = por %p37, %p38
      %p40 = scmp.ne.s32.totalorder %s32, %s34
      %p41 = scmp.eq.s32.totalorder %s29, 1
      %p42 = por %p40, %p41
      %p43 = scmp.ne.s32.totalorder %s34, %s35
      %p44 = scmp.eq.s32.totalorder %s29, 0
      %p45 = por %p43, %p44
      %p46 = scmp.ne.s32.totalorder %s34, %s35
      %p47 = scmp.eq.s32.totalorder %s30, 1
      %p48 = por %p46, %p47
      %p50 = scmp.ne.s32.totalorder %s35, %s49
      %p51 = scmp.eq.s32.totalorder %s30, 0
      %p52 = por %p50, %p51
      %s54 = sadd.s32 %s53, 1
      %p57 = scmp.eq.s32.totalorder %s24, 1
      %p58 = scmp.ne.s32.totalorder %s53, %s55
      %p59 = scmp.eq.s32.totalorder %s24, 0
      %p60 = por %p58, %p59
      %p61 = scmp.ne.s32.totalorder %s53, %s55
      %p62 = scmp.eq.s32.totalorder %s29, 1
      %p63 = por %p61, %p62
      %p64 = scmp.ne.s32.totalorder %s55, %s56
      %p65 = scmp.eq.s32.totalorder %s29, 0
      %p66 = por %p64, %p65
      %p67 = scmp.ne.s32.totalorder %s55, %s56
      %p68 = scmp.eq.s32.totalorder %s30, 1
      %p69 = por %p67, %p68
      %p71 = scmp.ne.s32.totalorder %s56, %s70
      %p72 = scmp.eq.s32.totalorder %s30, 0
      %p73 = por %p71, %p72
      %s75 = sadd.s32 %s74, 1
      %p78 = scmp.eq.s32.totalorder %s24, 1
      %p79 = scmp.ne.s32.totalorder %s74, %s76
      %p80 = scmp.eq.s32.totalorder %s24, 0
      %p81 = por %p79, %p80
      %p82 = scmp.ne.s32.totalorder %s74, %s76
      %p83 = scmp.eq.s32.totalorder %s29, 1
      %p84 = por %p82, %p83
      %p85 = scmp.ne.s32.totalorder %s76, %s77
      %p86 = scmp.eq.s32.totalorder %s29, 0
      %p87 = por %p85, %p86
      %p88 = scmp.ne.s32.totalorder %s76, %s77
      %p89 = scmp.eq.s32.totalorder %s30, 1
      %p90 = por %p88, %p89
      %p92 = scmp.ne.s32.totalorder %s77, %s91
      %p93 = scmp.eq.s32.totalorder %s30, 0
      %p94 = por %p92, %p93
      %s95 = ssub.s32 %s24, %s31
      %p96 = scmp.eq.s32.totalorder %s95, 0
      %s98 = sadd.s32 %s97, 1
      %s99 = scalar_select %p96, %s97, %s98
      %p102 = pneg %p96
      %p103 = scmp.eq.s32.totalorder %s24, 1
      %p104 = por %p102, %p103
      %p105 = scmp.ne.s32.totalorder %s97, %s100
      %p106 = scmp.eq.s32.totalorder %s24, 0
      %p107 = por %p105, %p106
      %p108 = scmp.ne.s32.totalorder %s97, %s100
      %p109 = scmp.eq.s32.totalorder %s29, 1
      %p110 = por %p108, %p109
      %p111 = scmp.ne.s32.totalorder %s100, %s101
      %p112 = scmp.eq.s32.totalorder %s29, 0
      %p113 = por %p111, %p112
      %p114 = scmp.ne.s32.totalorder %s100, %s101
      %p115 = scmp.eq.s32.totalorder %s30, 1
      %p116 = por %p114, %p115
      %p118 = scmp.ne.s32.totalorder %s101, %s117
      %p119 = scmp.eq.s32.totalorder %s30, 0
      %p120 = por %p118, %p119
      %s121 = ssub.s32 %s24, %s31
      %p122 = scmp.eq.s32.totalorder %s121, 0
      %s124 = sadd.s32 %s123, 1
      %s125 = scalar_select %p122, %s123, %s124
      %p128 = pneg %p122
      %p129 = scmp.eq.s32.totalorder %s24, 1
      %p130 = por %p128, %p129
      %p131 = scmp.ne.s32.totalorder %s123, %s126
      %p132 = scmp.eq.s32.totalorder %s24, 0
      %p133 = por %p131, %p132
      %p134 = scmp.ne.s32.totalorder %s123, %s126
      %p135 = scmp.eq.s32.totalorder %s29, 1
      %p136 = por %p134, %p135
      %p137 = scmp.ne.s32.totalorder %s126, %s127
      %p138 = scmp.eq.s32.totalorder %s29, 0
      %p139 = por %p137, %p138
      %p140 = scmp.ne.s32.totalorder %s126, %s127
      %p141 = scmp.eq.s32.totalorder %s30, 1
      %p142 = por %p140, %p141
      %p144 = scmp.ne.s32.totalorder %s127, %s143
      %p145 = scmp.eq.s32.totalorder %s30, 0
      %p146 = por %p144, %p145
      %s147 = ssub.s32 %s24, %s31
      %p148 = scmp.eq.s32.totalorder %s147, 0
      %s150 = sadd.s32 %s149, 1
      %s151 = scalar_select %p148, %s149, %s150
      %p154 = pneg %p148
      %p155 = scmp.eq.s32.totalorder %s24, 1
      %p156 = por %p154, %p155
      %p157 = scmp.ne.s32.totalorder %s149, %s152
      %p158 = scmp.eq.s32.totalorder %s24, 0
      %p159 = por %p157, %p158
      %p160 = scmp.ne.s32.totalorder %s149, %s152
      %p161 = scmp.eq.s32.totalorder %s29, 1
      %p162 = por %p160, %p161
      %p163 = scmp.ne.s32.totalorder %s152, %s153
      %p164 = scmp.eq.s32.totalorder %s29, 0
      %p165 = por %p163, %p164
      %p166 = scmp.ne.s32.totalorder %s152, %s153
      %p167 = scmp.eq.s32.totalorder %s30, 1
      %p168 = por %p166, %p167
      %p170 = scmp.ne.s32.totalorder %s153, %s169
      %p171 = scmp.eq.s32.totalorder %s30, 0
      %p172 = por %p170, %p171
      %s173 = ssub.s32 %s24, %s31
      %p174 = scmp.eq.s32.totalorder %s173, 0
      %s176 = sadd.s32 %s175, 1
      %s177 = scalar_select %p174, %s175, %s176
      %p180 = pneg %p174
      %p181 = scmp.eq.s32.totalorder %s24, 1
      %p182 = por %p180, %p181
      %p183 = scmp.ne.s32.totalorder %s175, %s178
      %p184 = scmp.eq.s32.totalorder %s24, 0
      %p185 = por %p183, %p184
      %p186 = scmp.ne.s32.totalorder %s175, %s178
      %p187 = scmp.eq.s32.totalorder %s29, 1
      %p188 = por %p186, %p187
      %p189 = scmp.ne.s32.totalorder %s178, %s179
      %p190 = scmp.eq.s32.totalorder %s29, 0
      %p191 = por %p189, %p190
      %p192 = scmp.ne.s32.totalorder %s178, %s179
      %p193 = scmp.eq.s32.totalorder %s30, 1
      %p194 = por %p192, %p193
      %p196 = scmp.ne.s32.totalorder %s179, %s195
      %p197 = scmp.eq.s32.totalorder %s30, 0
      %p198 = por %p196, %p197
      %s199 = ssub.s32 %s24, %s31
      %p200 = scmp.eq.s32.totalorder %s199, 0
      %s202 = sadd.s32 %s201, 1
      %s203 = scalar_select %p200, %s201, %s202
      %p206 = pneg %p200
      %p207 = scmp.eq.s32.totalorder %s24, 1
      %p208 = por %p206, %p207
      %p209 = scmp.ne.s32.totalorder %s201, %s204
      %p210 = scmp.eq.s32.totalorder %s24, 0
      %p211 = por %p209, %p210
      %p212 = scmp.ne.s32.totalorder %s201, %s204
      %p213 = scmp.eq.s32.totalorder %s29, 1
      %p214 = por %p212, %p213
      %p215 = scmp.ne.s32.totalorder %s204, %s205
      %p216 = scmp.eq.s32.totalorder %s29, 0
      %p217 = por %p215, %p216
      %p218 = scmp.ne.s32.totalorder %s204, %s205
      %p219 = scmp.eq.s32.totalorder %s30, 1
      %p220 = por %p218, %p219
      %p222 = scmp.ne.s32.totalorder %s205, %s221
      %p223 = scmp.eq.s32.totalorder %s30, 0
      %p224 = por %p222, %p223
      %p225 = scmp.le.s32.totalorder 1, %s24
      %p226 = scmp.lt.s32.totalorder %s24, 3
      %p227 = pnand %p225, %p226
      %p228 = pneg %p227
      // Predicated region
      $region9: #{tpu_custom_call.1} parent=5 // pred_check
        _
      $region10: #{tpu_custom_call.1} parent=5 // pred_check_branch
        %230 = sbr.rel (%p227) target = $region12
      $region11: #{tpu_custom_call.1} parent=5 // pred_region
        %s231 = ssub.s32 %s24, 1
        // Predicated region
        $region13: #{tpu_custom_call.1} parent=11 // pred_check
          %p232 = pneg %p45
        $region14: #{tpu_custom_call.1} parent=11 // pred_check_branch
          %234 = sbr.rel (%p232) target = $region16
        $region15: #{tpu_custom_call.1} parent=11 // pred_region
          %s236 = ssub.s32 256, 256
          %237 = vsyncadd [#allocation4], %s236
          %s239 = sshll.u32 [#allocation3], 4
          %s240 = int_to_ptr.vmem [resolvable:$true] %s239
          %242 = dma.hbm_to_vmem [thread:$0]  %s0, 256, %s240, [#allocation4]
        $region16: #{tpu_custom_call.1} parent=11 // pred_fallthru
          _
        // Predicated region
        $region17: #{tpu_custom_call.1} parent=11 // pred_check
          %p243 = pneg %p66
        $region18: #{tpu_custom_call.1} parent=11 // pred_check_branch
          %245 = sbr.rel (%p243) target = $region20
        $region19: #{tpu_custom_call.1} parent=11 // pred_region
          %s247 = ssub.s32 2048, 2048
          %248 = vsyncadd [#allocation7], %s247
          %s249 = sshll.u32 [#allocation6], 4
          %s250 = int_to_ptr.vmem [resolvable:$true] %s249
          %255 = dma.hbm_to_vmem [thread:$0]  %s1, 2048, %s250, [#allocation7], 64, 64, 4
        $region20: #{tpu_custom_call.1} parent=11 // pred_fallthru
          _
        // Predicated region
        $region21: #{tpu_custom_call.1} parent=11 // pred_check
          %p256 = pneg %p87
        $region22: #{tpu_custom_call.1} parent=11 // pred_check_branch
          %258 = sbr.rel (%p256) target = $region24
        $region23: #{tpu_custom_call.1} parent=11 // pred_region
          %s260 = ssub.s32 16, 16
          %261 = vsyncadd [#allocation7], %s260
          %s263 = sshll.u32 [#allocation8], 4
          %s264 = int_to_ptr.vmem [resolvable:$true] %s263
          %266 = dma.hbm_to_vmem [thread:$0]  %s2, 16, %s264, [#allocation7]
        $region24: #{tpu_custom_call.1} parent=11 // pred_fallthru
          _
      $region12: #{tpu_custom_call.1} parent=5 // pred_fallthru
        _
      %p267 = scmp.lt.s32.totalorder %s24, 2
      // Predicated region
      $region25: #{tpu_custom_call.1} parent=5 // pred_check
        %p268 = pneg %p267
      $region26: #{tpu_custom_call.1} parent=5 // pred_check_branch
        %270 = sbr.rel (%p268) target = $region28
      $region27: #{tpu_custom_call.1} parent=5 // pred_region
        // Predicated region
        $region29: #{tpu_custom_call.1} parent=27 // pred_check
          %p271 = pneg %p107
        $region30: #{tpu_custom_call.1} parent=27 // pred_check_branch
          %273 = sbr.rel (%p271) target = $region32
        $region31: #{tpu_custom_call.1} parent=27 // pred_region
          %s274 = sand.u32 %s24, 1
          %s275 = scalar_lea.sflag [#allocation10], %s274
          %s276 = sand.u32 %s97, 1
          %s277 = smul.addr %s276, 1920
          %s278 = scalar_lea.vmem [#allocation9], %s277
          %s279 = smul.u32 5, %s24
          %s281 = ssub.s32 30720, 30720
          %282 = vsyncadd %s275, %s281
          %s283 = smul.addr %s279, 64
          %s284 = scalar_lea.hbm %s3, %s283
          %s285 = sshll.u32 %s278, 4
          %s286 = int_to_ptr.vmem [resolvable:$true] %s285
          %291 = dma.hbm_to_vmem [thread:$0]  %s284, 30720, %s286, %s275, 640, 320, 20
        $region32: #{tpu_custom_call.1} parent=27 // pred_fallthru
          _
        // Predicated region
        $region33: #{tpu_custom_call.1} parent=27 // pred_check
          %p292 = pneg %p133
        $region34: #{tpu_custom_call.1} parent=27 // pred_check_branch
          %294 = sbr.rel (%p292) target = $region36
        $region35: #{tpu_custom_call.1} parent=27 // pred_region
          %s295 = sand.u32 %s24, 1
          %s296 = scalar_lea.sflag [#allocation10], %s295
          %s297 = sand.u32 %s123, 1
          %s298 = smul.addr %s297, 5
          %s299 = scalar_lea.vmem [#allocation11], %s298
          %s300 = smul.u32 5, %s24
          %s302 = ssub.s32 80, 80
          %303 = vsyncadd %s296, %s302
          %s304 = smul.addr %s300, 16
          %s305 = scalar_lea.hbm %s4, %s304
          %s307 = sshll.u32 %s299, 4
          %s308 = int_to_ptr.vmem [resolvable:$true] %s307
          %310 = dma.hbm_to_vmem [thread:$0]  %s305, 80, %s308, %s296
        $region36: #{tpu_custom_call.1} parent=27 // pred_fallthru
          _
        // Predicated region
        $region37: #{tpu_custom_call.1} parent=27 // pred_check
          %p311 = pneg %p159
        $region38: #{tpu_custom_call.1} parent=27 // pred_check_branch
          %313 = sbr.rel (%p311) target = $region40
        $region39: #{tpu_custom_call.1} parent=27 // pred_region
          %s314 = sand.u32 %s24, 1
          %s315 = scalar_lea.sflag [#allocation13], %s314
          %s316 = sand.u32 %s149, 1
          %s317 = smul.addr %s316, 5
          %s318 = scalar_lea.vmem [#allocation12], %s317
          %s319 = smul.u32 5, %s24
          %s321 = ssub.s32 80, 80
          %322 = vsyncadd %s315, %s321
          %s323 = smul.addr %s319, 16
          %s324 = scalar_lea.hbm %s5, %s323
          %s326 = sshll.u32 %s318, 4
          %s327 = int_to_ptr.vmem [resolvable:$true] %s326
          %329 = dma.hbm_to_vmem [thread:$0]  %s324, 80, %s327, %s315
        $region40: #{tpu_custom_call.1} parent=27 // pred_fallthru
          _
        // Predicated region
        $region41: #{tpu_custom_call.1} parent=27 // pred_check
          %p330 = pneg %p185
        $region42: #{tpu_custom_call.1} parent=27 // pred_check_branch
          %332 = sbr.rel (%p330) target = $region44
        $region43: #{tpu_custom_call.1} parent=27 // pred_region
          %s333 = sand.u32 %s24, 1
          %s334 = scalar_lea.sflag [#allocation13], %s333
          %s335 = sand.u32 %s175, 1
          %s336 = smul.addr %s335, 5
          %s337 = scalar_lea.vmem [#allocation14], %s336
          %s338 = smul.u32 5, %s24
          %s340 = ssub.s32 80, 80
          %341 = vsyncadd %s334, %s340
          %s342 = smul.addr %s338, 16
          %s343 = scalar_lea.hbm %s6, %s342
          %s345 = sshll.u32 %s337, 4
          %s346 = int_to_ptr.vmem [resolvable:$true] %s345
          %348 = dma.hbm_to_vmem [thread:$0]  %s343, 80, %s346, %s334
        $region44: #{tpu_custom_call.1} parent=27 // pred_fallthru
          _
      $region28: #{tpu_custom_call.1} parent=5 // pred_fallthru
        _
      %p349 = scmp.le.s32.totalorder 1, %s24
      %p350 = scmp.lt.s32.totalorder %s24, 3
      %p351 = pnand %p349, %p350
      %p352 = pneg %p351
      // Predicated region
      $region45: #{tpu_custom_call.1} parent=5 // pred_check
        _
      $region46: #{tpu_custom_call.1} parent=5 // pred_check_branch
        %354 = sbr.rel (%p351) target = $region48
      $region47: #{tpu_custom_call.1} parent=5 // pred_region
        %s355 = ssub.s32 %s24, 1
        // Predicated region
        $region49: #{tpu_custom_call.1} parent=47 // pred_check
          %p356 = pneg %p45
        $region50: #{tpu_custom_call.1} parent=47 // pred_check_branch
          %358 = sbr.rel (%p356) target = $region52
        $region51: #{tpu_custom_call.1} parent=47 // pred_region
          %359 = dma.done [#allocation4], 256
        $region52: #{tpu_custom_call.1} parent=47 // pred_fallthru
          _
        // Predicated region
        $region53: #{tpu_custom_call.1} parent=47 // pred_check
          %p360 = pneg %p66
        $region54: #{tpu_custom_call.1} parent=47 // pred_check_branch
          %362 = sbr.rel (%p360) target = $region56
        $region55: #{tpu_custom_call.1} parent=47 // pred_region
          %363 = dma.done [#allocation7], 2048
        $region56: #{tpu_custom_call.1} parent=47 // pred_fallthru
          _
        // Predicated region
        $region57: #{tpu_custom_call.1} parent=47 // pred_check
          %p364 = pneg %p87
        $region58: #{tpu_custom_call.1} parent=47 // pred_check_branch
          %366 = sbr.rel (%p364) target = $region60
        $region59: #{tpu_custom_call.1} parent=47 // pred_region
          %367 = dma.done [#allocation7], 16
        $region60: #{tpu_custom_call.1} parent=47 // pred_fallthru
          _
        %s368 = sand.u32 %s29, 1
        %s369 = scalar_lea.sflag [#allocation10], %s368
        %s370 = sand.u32 %s100, 1
        %s371 = smul.addr %s370, 1920
        %s372 = scalar_lea.vmem [#allocation9], %s371
        // Predicated region
        $region61: #{tpu_custom_call.1} parent=47 // pred_check
          %p373 = pneg %p113
        $region62: #{tpu_custom_call.1} parent=47 // pred_check_branch
          %375 = sbr.rel (%p373) target = $region64
        $region63: #{tpu_custom_call.1} parent=47 // pred_region
          %376 = dma.done %s369, 30720
        $region64: #{tpu_custom_call.1} parent=47 // pred_fallthru
          _
        %s377 = sand.u32 %s29, 1
        %s378 = scalar_lea.sflag [#allocation10], %s377
        %s379 = sand.u32 %s126, 1
        %s380 = smul.addr %s379, 5
        %s381 = scalar_lea.vmem [#allocation11], %s380
        // Predicated region
        $region65: #{tpu_custom_call.1} parent=47 // pred_check
          %p382 = pneg %p139
        $region66: #{tpu_custom_call.1} parent=47 // pred_check_branch
          %384 = sbr.rel (%p382) target = $region68
        $region67: #{tpu_custom_call.1} parent=47 // pred_region
          %385 = dma.done %s378, 80
        $region68: #{tpu_custom_call.1} parent=47 // pred_fallthru
          _
        %s386 = sand.u32 %s29, 1
        %s387 = scalar_lea.sflag [#allocation13], %s386
        %s388 = sand.u32 %s152, 1
        %s389 = smul.addr %s388, 5
        %s390 = scalar_lea.vmem [#allocation12], %s389
        // Predicated region
        $region69: #{tpu_custom_call.1} parent=47 // pred_check
          %p391 = pneg %p165
        $region70: #{tpu_custom_call.1} parent=47 // pred_check_branch
          %393 = sbr.rel (%p391) target = $region72
        $region71: #{tpu_custom_call.1} parent=47 // pred_region
          %394 = dma.done %s387, 80
        $region72: #{tpu_custom_call.1} parent=47 // pred_fallthru
          _
        %s395 = sand.u32 %s29, 1
        %s396 = scalar_lea.sflag [#allocation13], %s395
        %s397 = sand.u32 %s178, 1
        %s398 = smul.addr %s397, 5
        %s399 = scalar_lea.vmem [#allocation14], %s398
        // Predicated region
        $region73: #{tpu_custom_call.1} parent=47 // pred_check
          %p400 = pneg %p191
        $region74: #{tpu_custom_call.1} parent=47 // pred_check_branch
          %402 = sbr.rel (%p400) target = $region76
        $region75: #{tpu_custom_call.1} parent=47 // pred_region
          %403 = dma.done %s396, 80
        $region76: #{tpu_custom_call.1} parent=47 // pred_fallthru
          _
        %p404 = pneg %p45
        %p405 = pneg %p42
        %p406 = pneg %p66
        %p407 = pneg %p63
        %p408 = pneg %p87
        %p409 = pneg %p84
        %s410 = sand.u32 %s29, 1
        %s411 = scalar_lea.sflag [#allocation10], %s410
        %s412 = sand.u32 %s100, 1
        %s413 = smul.addr %s412, 1920
        %s414 = scalar_lea.vmem [#allocation9], %s413
        %p415 = pneg %p113
        %p416 = pneg %p110
        %s417 = sand.u32 %s29, 1
        %s418 = scalar_lea.sflag [#allocation10], %s417
        %s419 = sand.u32 %s126, 1
        %s420 = smul.addr %s419, 5
        %s421 = scalar_lea.vmem [#allocation11], %s420
        %p422 = pneg %p139
        %p423 = pneg %p136
        %s424 = sand.u32 %s29, 1
        %s425 = scalar_lea.sflag [#allocation13], %s424
        %s426 = sand.u32 %s152, 1
        %s427 = smul.addr %s426, 5
        %s428 = scalar_lea.vmem [#allocation12], %s427
        %p429 = pneg %p165
        %p430 = pneg %p162
        %s431 = sand.u32 %s29, 1
        %s432 = scalar_lea.sflag [#allocation13], %s431
        %s433 = sand.u32 %s178, 1
        %s434 = smul.addr %s433, 5
        %s435 = scalar_lea.vmem [#allocation14], %s434
        %p436 = pneg %p191
        %p437 = pneg %p188
        %p438 = pneg %p217
        %p439 = pneg %p214
        %s440 = sand.u32 %s204, 1
        %s441 = scalar_lea.sflag [#allocation5], %s440
        %s442 = sand.u32 %s204, 1
        %s443 = smul.addr %s442, 40
        %s444 = scalar_lea.vmem [#allocation15], %s443
        %s445 = smul.u32 5, %s29
        %s446 = smul.u32 5, %s29
        %s447 = smul.u32 5, %s29
        %s448 = smul.u32 5, %s29
        %s449 = smul.u32 5, %s29
        %v450 = vld [vmem:[#allocation3] sm:$0xff]
        %v451 = vld [vmem:[#allocation3 + $0x8] sm:$0xff]
        %v452 = vld [vmem:[#allocation6] sm:$0xf]
        %v453 = vld [vmem:[#allocation6 + $0x4] sm:$0xf]
        %v454 = vld [vmem:[#allocation6 + $0x8] sm:$0xf]
        %v455 = vld [vmem:[#allocation6 + $0xc] sm:$0xf]
        %v456 = vld [vmem:[#allocation6 + $0x10] sm:$0xf]
        %v457 = vld [vmem:[#allocation6 + $0x14] sm:$0xf]
        %v458 = vld [vmem:[#allocation6 + $0x18] sm:$0xf]
        %v459 = vld [vmem:[#allocation6 + $0x1c] sm:$0xf]
        %v460 = vld [vmem:[#allocation6 + $0x20] sm:$0xf]
        %v461 = vld [vmem:[#allocation6 + $0x24] sm:$0xf]
        %v462 = vld [vmem:[#allocation6 + $0x28] sm:$0xf]
        %v463 = vld [vmem:[#allocation6 + $0x2c] sm:$0xf]
        %v464 = vld [vmem:[#allocation6 + $0x30] sm:$0xf]
        %v465 = vld [vmem:[#allocation6 + $0x34] sm:$0xf]
        %v466 = vld [vmem:[#allocation6 + $0x38] sm:$0xf]
        %v467 = vld [vmem:[#allocation6 + $0x3c] sm:$0xf]
        %v468 = vld [vmem:[#allocation6 + $0x40] sm:$0xf]
        %v469 = vld [vmem:[#allocation6 + $0x44] sm:$0xf]
        %v470 = vld [vmem:[#allocation6 + $0x48] sm:$0xf]
        %v471 = vld [vmem:[#allocation6 + $0x4c] sm:$0xf]
        %v472 = vld [vmem:[#allocation6 + $0x50] sm:$0xf]
        %v473 = vld [vmem:[#allocation6 + $0x54] sm:$0xf]
        %v474 = vld [vmem:[#allocation6 + $0x58] sm:$0xf]
        %v475 = vld [vmem:[#allocation6 + $0x5c] sm:$0xf]
        %v476 = vld [vmem:[#allocation6 + $0x60] sm:$0xf]
        %v477 = vld [vmem:[#allocation6 + $0x64] sm:$0xf]
        %v478 = vld [vmem:[#allocation6 + $0x68] sm:$0xf]
        %v479 = vld [vmem:[#allocation6 + $0x6c] sm:$0xf]
        %v480 = vld [vmem:[#allocation6 + $0x70] sm:$0xf]
        %v481 = vld [vmem:[#allocation6 + $0x74] sm:$0xf]
        %v482 = vld [vmem:[#allocation6 + $0x78] sm:$0xf]
        %v483 = vld [vmem:[#allocation6 + $0x7c] sm:$0xf]
        %v484 = vld [vmem:[#allocation8] sm:$0x1]
        %v485 = vunpack.c.l.bf16 %v452
        %v486 = vunpack.c.l.bf16 %v453
        %v487 = vunpack.c.l.bf16 %v454
        %v488 = vunpack.c.l.bf16 %v455
        %v489 = vunpack.c.l.bf16 %v456
        %v490 = vunpack.c.l.bf16 %v457
        %v491 = vunpack.c.l.bf16 %v458
        %v492 = vunpack.c.l.bf16 %v459
        %v493 = vunpack.c.l.bf16 %v460
        %v494 = vunpack.c.l.bf16 %v461
        %v495 = vunpack.c.l.bf16 %v462
        %v496 = vunpack.c.l.bf16 %v463
        %v497 = vunpack.c.l.bf16 %v464
        %v498 = vunpack.c.l.bf16 %v465
        %v499 = vunpack.c.l.bf16 %v466
        %v500 = vunpack.c.l.bf16 %v467
        %v501 = vunpack.c.l.bf16 %v468
        %v502 = vunpack.c.l.bf16 %v469
        %v503 = vunpack.c.l.bf16 %v470
        %v504 = vunpack.c.l.bf16 %v471
        %v505 = vunpack.c.l.bf16 %v472
        %v506 = vunpack.c.l.bf16 %v473
        %v507 = vunpack.c.l.bf16 %v474
        %v508 = vunpack.c.l.bf16 %v475
        %v509 = vunpack.c.l.bf16 %v476
        %v510 = vunpack.c.l.bf16 %v477
        %v511 = vunpack.c.l.bf16 %v478
        %v512 = vunpack.c.l.bf16 %v479
        %v513 = vunpack.c.l.bf16 %v480
        %v514 = vunpack.c.l.bf16 %v481
        %v515 = vunpack.c.l.bf16 %v482
        %v516 = vunpack.c.l.bf16 %v483
        %v518 = vlaneseq
        %v519 = vshrl.u32 %v518, 7
        %v520 = vsub.s32 0, %v519
        %v521 = vrot.slane %v484, %v520
        %523 = vmatprep.subr.mxu0 0.0
        %524 = vmatpush1.msra.mxu0 %v500
        %525 = vmatprep.subr.mxu0 0.0
        %526 = vmatpush1.msra.mxu0 %v499
        %527 = vmatprep.subr.mxu0 0.0
        %528 = vmatpush1.msra.mxu0 %v498
        %529 = vmatprep.subr.mxu0 0.0
        %530 = vmatpush1.msra.mxu0 %v497
        %531 = vmatprep.subr.mxu0 0.0
        %532 = vmatpush1.msra.mxu0 %v496
        %533 = vmatprep.subr.mxu0 0.0
        %534 = vmatpush1.msra.mxu0 %v495
        %535 = vmatprep.subr.mxu0 0.0
        %536 = vmatpush1.msra.mxu0 %v494
        %537 = vmatprep.subr.mxu0 0.0
        %538 = vmatpush1.msra.mxu0 %v493
        %539 = vmatprep.subr.mxu0 0.0
        %540 = vmatpush1.msra.mxu0 %v492
        %541 = vmatprep.subr.mxu0 0.0
        %542 = vmatpush1.msra.mxu0 %v491
        %543 = vmatprep.subr.mxu0 0.0
        %544 = vmatpush1.msra.mxu0 %v490
        %545 = vmatprep.subr.mxu0 0.0
        %546 = vmatpush1.msra.mxu0 %v489
        %547 = vmatprep.subr.mxu0 0.0
        %548 = vmatpush1.msra.mxu0 %v488
        %549 = vmatprep.subr.mxu0 0.0
        %550 = vmatpush1.msra.mxu0 %v487
        %551 = vmatprep.subr.mxu0 0.0
        %552 = vmatpush1.msra.mxu0 %v486
        %553 = vmatprep.subr.mxu0 0.0
        %554 = vmatpush1.msra.mxu0 %v485
        %555 = vmatprep.subr.mxu0 0.0
        %556 = vmatpush2.msra.mxu0 %v516
        %557 = vmatprep.subr.mxu0 0.0
        %558 = vmatpush2.msra.mxu0 %v515
        %559 = vmatprep.subr.mxu0 0.0
        %560 = vmatpush2.msra.mxu0 %v514
        %561 = vmatprep.subr.mxu0 0.0
        %562 = vmatpush2.msra.mxu0 %v513
        %563 = vmatprep.subr.mxu0 0.0
        %564 = vmatpush2.msra.mxu0 %v512
        %565 = vmatprep.subr.mxu0 0.0
        %566 = vmatpush2.msra.mxu0 %v511
        %567 = vmatprep.subr.mxu0 0.0
        %568 = vmatpush2.msra.mxu0 %v510
        %569 = vmatprep.subr.mxu0 0.0
        %570 = vmatpush2.msra.mxu0 %v509
        %571 = vmatprep.subr.mxu0 0.0
        %572 = vmatpush2.msra.mxu0 %v508
        %573 = vmatprep.subr.mxu0 0.0
        %574 = vmatpush2.msra.mxu0 %v507
        %575 = vmatprep.subr.mxu0 0.0
        %576 = vmatpush2.msra.mxu0 %v506
        %577 = vmatprep.subr.mxu0 0.0
        %578 = vmatpush2.msra.mxu0 %v505
        %579 = vmatprep.subr.mxu0 0.0
        %580 = vmatpush2.msra.mxu0 %v504
        %581 = vmatprep.subr.mxu0 0.0
        %582 = vmatpush2.msra.mxu0 %v503
        %583 = vmatprep.subr.mxu0 0.0
        %584 = vmatpush2.msra.mxu0 %v502
        %585 = vmatprep.subr.mxu0 0.0
        %586 = vmatpush2.msra.mxu0 %v501
        %587 = vmatprep.mubr.f32.mxu0 %v451
        %588 = vmatmul.mubr.f32.gmra.mxu0 %v450
        %v589 = vpop.f32.mrf.mxu0
        %v590 = vadd.f32 %v521, %v589
        %v591 = vpop.f32.mrf.mxu0
        %592 = vdwg.mxu0
        %v593 = vsub.f32 0.0, %v590
        %v594 = vmul.f32 %v593, 1.442695
        %v595 = vpow.pop %v594
        %v596 = vadd.f32 %v595, 1.0
        %v597 = vrcp.pop %v596
        %v598 = vmul.f32 1.0, %v597
        %v599 = vlaneseq
        %v600 = vand.u32 %v599, 127
        %vm601 = vcmp.lt.s32.totalorder %v600, 10
        %v602 = vsel %vm601, %v598, 0.0
        %603 = vmatprep.subr.mxu0 0.0
        %604 = vmatpush1.xpose.msra.mxu0 0.0
        %605 = vmatprep.subr.mxu0 0.0
        %606 = vmatpush1.xpose.msra.mxu0 0.0
        %607 = vmatprep.subr.mxu0 0.0
        %608 = vmatpush1.xpose.msra.mxu0 0.0
        %609 = vmatprep.subr.mxu0 0.0
        %610 = vmatpush1.xpose.msra.mxu0 0.0
        %611 = vmatprep.subr.mxu0 0.0
        %612 = vmatpush1.xpose.msra.mxu0 0.0
        %613 = vmatprep.subr.mxu0 0.0
        %614 = vmatpush1.xpose.msra.mxu0 0.0
        %615 = vmatprep.subr.mxu0 0.0
        %616 = vmatpush1.xpose.msra.mxu0 0.0
        %617 = vmatprep.subr.mxu0 0.0
        %618 = vmatpush1.xpose.msra.mxu0 0.0
        %619 = vmatprep.subr.mxu0 0.0
        %620 = vmatpush1.xpose.msra.mxu0 0.0
        %621 = vmatprep.subr.mxu0 0.0
        %622 = vmatpush1.xpose.msra.mxu0 0.0
        %623 = vmatprep.subr.mxu0 0.0
        %624 = vmatpush1.xpose.msra.mxu0 0.0
        %625 = vmatprep.subr.mxu0 0.0
        %626 = vmatpush1.xpose.msra.mxu0 0.0
        %627 = vmatprep.subr.mxu0 0.0
        %628 = vmatpush1.xpose.msra.mxu0 0.0
        %629 = vmatprep.subr.mxu0 0.0
        %630 = vmatpush1.xpose.msra.mxu0 0.0
        %631 = vmatprep.subr.mxu0 0.0
        %632 = vmatpush1.xpose.msra.mxu0 0.0
        %633 = vmatprep.subr.mxu0 0.0
        %634 = vmatpush1.xpose.msra.mxu0 %v602
        %635 = vmatprep.subr.mxu0 0.0
        %636 = vmatpush2.xpose.msra.mxu0 0.0
        %637 = vmatprep.subr.mxu0 0.0
        %638 = vmatpush2.xpose.msra.mxu0 0.0
        %639 = vmatprep.subr.mxu0 0.0
        %640 = vmatpush2.xpose.msra.mxu0 0.0
        %641 = vmatprep.subr.mxu0 0.0
        %642 = vmatpush2.xpose.msra.mxu0 0.0
        %643 = vmatprep.subr.mxu0 0.0
        %644 = vmatpush2.xpose.msra.mxu0 0.0
        %645 = vmatprep.subr.mxu0 0.0
        %646 = vmatpush2.xpose.msra.mxu0 0.0
        %647 = vmatprep.subr.mxu0 0.0
        %648 = vmatpush2.xpose.msra.mxu0 0.0
        %649 = vmatprep.subr.mxu0 0.0
        %650 = vmatpush2.xpose.msra.mxu0 0.0
        %651 = vmatprep.subr.mxu0 0.0
        %652 = vmatpush2.xpose.msra.mxu0 0.0
        %653 = vmatprep.subr.mxu0 0.0
        %654 = vmatpush2.xpose.msra.mxu0 0.0
        %655 = vmatprep.subr.mxu0 0.0
        %656 = vmatpush2.xpose.msra.mxu0 0.0
        %657 = vmatprep.subr.mxu0 0.0
        %658 = vmatpush2.xpose.msra.mxu0 0.0
        %659 = vmatprep.subr.mxu0 0.0
        %660 = vmatpush2.xpose.msra.mxu0 0.0
        %661 = vmatprep.subr.mxu0 0.0
        %662 = vmatpush2.xpose.msra.mxu0 0.0
        %663 = vmatprep.subr.mxu0 0.0
        %664 = vmatpush2.xpose.msra.mxu0 0.0
        %665 = vmatprep.subr.mxu0 0.0
        %666 = vmatpush2.xpose.msra.mxu0 0.0
        %667 = vmatprep.mubr.f32.mxu0 0.0
        %668 = vmatmul.mubr.f32.gmra.mxu0 %v602
        %v669 = vpop.f32.mrf.mxu0
        %v670 = vadd.f32 0.0, %v669
        %v671 = vpop.f32.mrf.mxu0
        %672 = vdwg.mxu0
        %vm673 = vcmask 64512
        %v674 = vsel %vm673, %v670, -inf
        %v675 = vrot.slane %v674, 4
        %v676 = vmax.f32 %v674, %v675
        %v677 = vrot.slane %v676, 2
        %v678 = vmax.f32 %v676, %v677
        %v679 = vrot.slane %v678, 1
        %v680 = vmax.f32 %v678, %v679
        %v681 = vrcp.pop %v680
        %v682 = vmul.f32 %v670, %v681
        %v683 = vlaneseq
        %v684 = vshrl.u32 %v683, 7
        %vm685 = vcmp.eq.s32.totalorder %v684, %v600
        %v686 = vsel %vm685, 0.0, %v682
        %v687 = vsel %vm673, %v686, 0.0
        %688 = vadd.xlane.f32.xlu0 %v687
        %v689 = vpop.xlane.xlu0 %688
        %vm690 = vcmp.gt.f32.partialorder %v689, 0.0
        %v691 = vrsqrt.pop %v689
        %v692 = vsel %vm690, %v691, 0.0
        %v693 = vmul.f32 %v692, %v686
        %694 = vxpose.xlu0.b32.start [1/16] %v692, 128
        %695 = vxpose.xlu0.b32.cont [2/16] 0.0, 128
        %696 = vxpose.xlu0.b32.cont [3/16] 0.0, 128
        %697 = vxpose.xlu0.b32.cont [4/16] 0.0, 128
        %698 = vxpose.xlu0.b32.cont [5/16] 0.0, 128
        %699 = vxpose.xlu0.b32.cont [6/16] 0.0, 128
        %700 = vxpose.xlu0.b32.cont [7/16] 0.0, 128
        %701 = vxpose.xlu0.b32.cont [8/16] 0.0, 128
        %702 = vxpose.xlu0.b32.cont [9/16] 0.0, 128
        %703 = vxpose.xlu0.b32.cont [10/16] 0.0, 128
        %704 = vxpose.xlu0.b32.cont [11/16] 0.0, 128
        %705 = vxpose.xlu0.b32.cont [12/16] 0.0, 128
        %706 = vxpose.xlu0.b32.cont [13/16] 0.0, 128
        %707 = vxpose.xlu0.b32.cont [14/16] 0.0, 128
        %708 = vxpose.xlu0.b32.cont [15/16] 0.0, 128
        %709 = vxpose.xlu0.b32.end [16/16] 0.0, 128
        %v710 = vpop.trf.xlu0
        %v711 = vpop.trf.xlu0
        %v712 = vpop.trf.xlu0
        %v713 = vpop.trf.xlu0
        %v714 = vpop.trf.xlu0
        %v715 = vpop.trf.xlu0
        %v716 = vpop.trf.xlu0
        %v717 = vpop.trf.xlu0
        %v718 = vpop.trf.xlu0
        %v719 = vpop.trf.xlu0
        %v720 = vpop.trf.xlu0
        %v721 = vpop.trf.xlu0
        %v722 = vpop.trf.xlu0
        %v723 = vpop.trf.xlu0
        %v724 = vpop.trf.xlu0
        %v725 = vpop.trf.xlu0
        %v726 = vlaneseq
        %v727 = vshrl.u32 %v726, 7
        %v728 = vsub.s32 0, %v727
        %v729 = vrot.slane %v710, %v728
        %v730 = vmul.f32 %v693, %v729
        %731 = vxpose.xlu0.b32.start [1/16] %v730, 128
        %732 = vxpose.xlu0.b32.cont [2/16] 0.0, 128
        %733 = vxpose.xlu0.b32.cont [3/16] 0.0, 128
        %734 = vxpose.xlu0.b32.cont [4/16] 0.0, 128
        %735 = vxpose.xlu0.b32.cont [5/16] 0.0, 128
        %736 = vxpose.xlu0.b32.cont [6/16] 0.0, 128
        %737 = vxpose.xlu0.b32.cont [7/16] 0.0, 128
        %738 = vxpose.xlu0.b32.cont [8/16] 0.0, 128
        %739 = vxpose.xlu0.b32.cont [9/16] 0.0, 128
        %740 = vxpose.xlu0.b32.cont [10/16] 0.0, 128
        %741 = vxpose.xlu0.b32.cont [11/16] 0.0, 128
        %742 = vxpose.xlu0.b32.cont [12/16] 0.0, 128
        %743 = vxpose.xlu0.b32.cont [13/16] 0.0, 128
        %744 = vxpose.xlu0.b32.cont [14/16] 0.0, 128
        %745 = vxpose.xlu0.b32.cont [15/16] 0.0, 128
        %746 = vxpose.xlu0.b32.end [16/16] 0.0, 128
        %v747 = vpop.trf.xlu0
        %v748 = vpop.trf.xlu0
        %v749 = vpop.trf.xlu0
        %v750 = vpop.trf.xlu0
        %v751 = vpop.trf.xlu0
        %v752 = vpop.trf.xlu0
        %v753 = vpop.trf.xlu0
        %v754 = vpop.trf.xlu0
        %v755 = vpop.trf.xlu0
        %v756 = vpop.trf.xlu0
        %v757 = vpop.trf.xlu0
        %v758 = vpop.trf.xlu0
        %v759 = vpop.trf.xlu0
        %v760 = vpop.trf.xlu0
        %v761 = vpop.trf.xlu0
        %v762 = vpop.trf.xlu0
        %v763 = vsub.f32 0.0, %v747
        %v765 = vsel %vm673, %v763, 0
        %767 = vmatprep.subr.mxu0 0.0
        %768 = vmatpush1.msra.mxu0 0.0
        %769 = vmatprep.subr.mxu0 0.0
        %770 = vmatpush1.msra.mxu0 0.0
        %771 = vmatprep.subr.mxu0 0.0
        %772 = vmatpush1.msra.mxu0 0.0
        %773 = vmatprep.subr.mxu0 0.0
        %774 = vmatpush1.msra.mxu0 0.0
        %775 = vmatprep.subr.mxu0 0.0
        %776 = vmatpush1.msra.mxu0 0.0
        %777 = vmatprep.subr.mxu0 0.0
        %778 = vmatpush1.msra.mxu0 0.0
        %779 = vmatprep.subr.mxu0 0.0
        %780 = vmatpush1.msra.mxu0 0.0
        %781 = vmatprep.subr.mxu0 0.0
        %782 = vmatpush1.msra.mxu0 0.0
        %783 = vmatprep.subr.mxu0 0.0
        %784 = vmatpush1.msra.mxu0 0.0
        %785 = vmatprep.subr.mxu0 0.0
        %786 = vmatpush1.msra.mxu0 0.0
        %787 = vmatprep.subr.mxu0 0.0
        %788 = vmatpush1.msra.mxu0 0.0
        %789 = vmatprep.subr.mxu0 0.0
        %790 = vmatpush1.msra.mxu0 0.0
        %791 = vmatprep.subr.mxu0 0.0
        %792 = vmatpush1.msra.mxu0 0.0
        %793 = vmatprep.subr.mxu0 0.0
        %794 = vmatpush1.msra.mxu0 0.0
        %795 = vmatprep.subr.mxu0 0.0
        %796 = vmatpush1.msra.mxu0 0.0
        %797 = vmatprep.subr.mxu0 %v451
        %798 = vmatpush1.msra.mxu0 %v450
        %799 = vmatprep.subr.mxu0 0.0
        %800 = vmatpush2.msra.mxu0 0.0
        %801 = vmatprep.subr.mxu0 0.0
        %802 = vmatpush2.msra.mxu0 0.0
        %803 = vmatprep.subr.mxu0 0.0
        %804 = vmatpush2.msra.mxu0 0.0
        %805 = vmatprep.subr.mxu0 0.0
        %806 = vmatpush2.msra.mxu0 0.0
        %807 = vmatprep.subr.mxu0 0.0
        %808 = vmatpush2.msra.mxu0 0.0
        %809 = vmatprep.subr.mxu0 0.0
        %810 = vmatpush2.msra.mxu0 0.0
        %811 = vmatprep.subr.mxu0 0.0
        %812 = vmatpush2.msra.mxu0 0.0
        %813 = vmatprep.subr.mxu0 0.0
        %814 = vmatpush2.msra.mxu0 0.0
        %815 = vmatprep.subr.mxu0 0.0
        %816 = vmatpush2.msra.mxu0 0.0
        %817 = vmatprep.subr.mxu0 0.0
        %818 = vmatpush2.msra.mxu0 0.0
        %819 = vmatprep.subr.mxu0 0.0
        %820 = vmatpush2.msra.mxu0 0.0
        %821 = vmatprep.subr.mxu0 0.0
        %822 = vmatpush2.msra.mxu0 0.0
        %823 = vmatprep.subr.mxu0 0.0
        %824 = vmatpush2.msra.mxu0 0.0
        %825 = vmatprep.subr.mxu0 0.0
        %826 = vmatpush2.msra.mxu0 0.0
        %827 = vmatprep.subr.mxu0 0.0
        %828 = vmatpush2.msra.mxu0 0.0
        %829 = vmatprep.subr.mxu0 0.0
        %830 = vmatpush2.msra.mxu0 0.0
        %831 = vmatprep.mubr.f32.mxu0 0.0
        %832 = vmatmul.mubr.f32.gmra.mxu0 %v765
        %v833 = vpop.f32.mrf.mxu0
        %v834 = vadd.f32 0.0, %v833
        %v835 = vpop.f32.mrf.mxu0
        %v836 = vadd.f32 0.0, %v835
        %837 = vdwg.mxu0
        %838 = vmatprep.subr.mxu0 0.0
        %839 = vmatpush1.msra.mxu0 0.0
        %840 = vmatprep.subr.mxu0 0.0
        %841 = vmatpush1.msra.mxu0 0.0
        %842 = vmatprep.subr.mxu0 0.0
        %843 = vmatpush1.msra.mxu0 0.0
        %844 = vmatprep.subr.mxu0 0.0
        %845 = vmatpush1.msra.mxu0 0.0
        %846 = vmatprep.subr.mxu0 0.0
        %847 = vmatpush1.msra.mxu0 0.0
        %848 = vmatprep.subr.mxu0 0.0
        %849 = vmatpush1.msra.mxu0 0.0
        %850 = vmatprep.subr.mxu0 0.0
        %851 = vmatpush1.msra.mxu0 0.0
        %852 = vmatprep.subr.mxu0 0.0
        %853 = vmatpush1.msra.mxu0 0.0
        %854 = vmatprep.subr.mxu0 0.0
        %855 = vmatpush1.msra.mxu0 0.0
        %856 = vmatprep.subr.mxu0 0.0
        %857 = vmatpush1.msra.mxu0 0.0
        %858 = vmatprep.subr.mxu0 0.0
        %859 = vmatpush1.msra.mxu0 0.0
        %860 = vmatprep.subr.mxu0 0.0
        %861 = vmatpush1.msra.mxu0 0.0
        %862 = vmatprep.subr.mxu0 0.0
        %863 = vmatpush1.msra.mxu0 0.0
        %864 = vmatprep.subr.mxu0 0.0
        %865 = vmatpush1.msra.mxu0 0.0
        %866 = vmatprep.subr.mxu0 0.0
        %867 = vmatpush1.msra.mxu0 0.0
        %868 = vmatprep.subr.mxu0 %v836
        %869 = vmatpush1.msra.mxu0 %v834
        %870 = vmatprep.subr.mxu0 0.0
        %871 = vmatpush2.msra.mxu0 0.0
        %872 = vmatprep.subr.mxu0 0.0
        %873 = vmatpush2.msra.mxu0 0.0
        %874 = vmatprep.subr.mxu0 0.0
        %875 = vmatpush2.msra.mxu0 0.0
        %876 = vmatprep.subr.mxu0 0.0
        %877 = vmatpush2.msra.mxu0 0.0
        %878 = vmatprep.subr.mxu0 0.0
        %879 = vmatpush2.msra.mxu0 0.0
        %880 = vmatprep.subr.mxu0 0.0
        %881 = vmatpush2.msra.mxu0 0.0
        %882 = vmatprep.subr.mxu0 0.0
        %883 = vmatpush2.msra.mxu0 0.0
        %884 = vmatprep.subr.mxu0 0.0
        %885 = vmatpush2.msra.mxu0 0.0
        %886 = vmatprep.subr.mxu0 0.0
        %887 = vmatpush2.msra.mxu0 0.0
        %888 = vmatprep.subr.mxu0 0.0
        %889 = vmatpush2.msra.mxu0 0.0
        %890 = vmatprep.subr.mxu0 0.0
        %891 = vmatpush2.msra.mxu0 0.0
        %892 = vmatprep.subr.mxu0 0.0
        %893 = vmatpush2.msra.mxu0 0.0
        %894 = vmatprep.subr.mxu0 0.0
        %895 = vmatpush2.msra.mxu0 0.0
        %896 = vmatprep.subr.mxu0 0.0
        %897 = vmatpush2.msra.mxu0 0.0
        %898 = vmatprep.subr.mxu0 0.0
        %899 = vmatpush2.msra.mxu0 0.0
        %900 = vmatprep.subr.mxu0 0.0
        %901 = vmatpush2.msra.mxu0 0.0
        %902 = vmatprep.mubr.f32.mxu0 0.0
        %903 = vmatmul.mubr.f32.gmra.mxu0 %v765
        %v904 = vpop.f32.mrf.mxu0
        %v905 = vadd.f32 0.0, %v904
        %v906 = vpop.f32.mrf.mxu0
        %v907 = vadd.f32 0.0, %v906
        %908 = vdwg.mxu0
        %v909 = vmul.f32 %v905, 2.0
        %v910 = vmul.f32 %v907, 2.0
        %v911 = vsub.f32 %v909, %v450
        %v912 = vsub.f32 %v910, %v451
        %913 = vst [vmem:[#allocation2] sm:$0xff] %v450
        %914 = vst [vmem:[#allocation2 + $0x8] sm:$0xff] %v451
        %915 = vst [vmem:[#allocation2 + $0x10] sm:$0xff] %v834
        %916 = vst [vmem:[#allocation2 + $0x18] sm:$0xff] %v836
        %917 = vst [vmem:[#allocation2 + $0x20] sm:$0xff] %v911
        %918 = vst [vmem:[#allocation2 + $0x28] sm:$0xff] %v912
        %v919 = vld [vmem:[#allocation2] sm:$0xff]
        %v920 = vld [vmem:[#allocation2 + $0x8] sm:$0xff]
        %v921 = vld [vmem:[#allocation2 + $0x10] sm:$0xff]
        %v922 = vld [vmem:[#allocation2 + $0x18] sm:$0xff]
        %v923 = vld [vmem:[#allocation2 + $0x20] sm:$0xff]
        %v924 = vld [vmem:[#allocation2 + $0x28] sm:$0xff]
        %v925 = vld [vmem:[%s372] sm:$0xff]
        %v926 = vld [vmem:[%s372 + $0x8] sm:$0xff]
        %v927 = vld [vmem:[%s372 + $0x10] sm:$0xf]
        %v928 = vld [vmem:[%s372 + $0x14] sm:$0xff]
        %v929 = vld [vmem:[%s372 + $0x1c] sm:$0xff]
        %v930 = vld [vmem:[%s372 + $0x24] sm:$0xf]
        %v931 = vld [vmem:[%s372 + $0x28] sm:$0xff]
        %v932 = vld [vmem:[%s372 + $0x30] sm:$0xff]
        %v933 = vld [vmem:[%s372 + $0x38] sm:$0xf]
        %v934 = vld [vmem:[%s372 + $0x3c] sm:$0xff]
        %v935 = vld [vmem:[%s372 + $0x44] sm:$0xff]
        %v936 = vld [vmem:[%s372 + $0x4c] sm:$0xf]
        %v937 = vld [vmem:[%s372 + $0x50] sm:$0xff]
        %v938 = vld [vmem:[%s372 + $0x58] sm:$0xff]
        %v939 = vld [vmem:[%s372 + $0x60] sm:$0xf]
        %v940 = vld [vmem:[%s372 + $0x64] sm:$0xff]
        %v941 = vld [vmem:[%s372 + $0x6c] sm:$0xff]
        %v942 = vld [vmem:[%s372 + $0x74] sm:$0xf]
        %v943 = vld [vmem:[%s372 + $0x78] sm:$0xff]
        %v944 = vld [vmem:[%s372 + $0x80] sm:$0xff]
        %v945 = vld [vmem:[%s372 + $0x88] sm:$0xf]
        %v946 = vld [vmem:[%s372 + $0x8c] sm:$0xff]
        %v947 = vld [vmem:[%s372 + $0x94] sm:$0xff]
        %v948 = vld [vmem:[%s372 + $0x9c] sm:$0xf]
        %v949 = vld [vmem:[%s372 + $0xa0] sm:$0xff]
        %v950 = vld [vmem:[%s372 + $0xa8] sm:$0xff]
        %v951 = vld [vmem:[%s372 + $0xb0] sm:$0xf]
        %v952 = vld [vmem:[%s372 + $0xb4] sm:$0xff]
        %v953 = vld [vmem:[%s372 + $0xbc] sm:$0xff]
        %v954 = vld [vmem:[%s372 + $0xc4] sm:$0xf]
        %v955 = vld [vmem:[%s372 + $0xc8] sm:$0xff]
        %v956 = vld [vmem:[%s372 + $0xd0] sm:$0xff]
        %v957 = vld [vmem:[%s372 + $0xd8] sm:$0xf]
        %v958 = vld [vmem:[%s372 + $0xdc] sm:$0xff]
        %v959 = vld [vmem:[%s372 + $0xe4] sm:$0xff]
        %v960 = vld [vmem:[%s372 + $0xec] sm:$0xf]
        %v961 = vld [vmem:[%s372 + $0xf0] sm:$0xff]
        %v962 = vld [vmem:[%s372 + $0xf8] sm:$0xff]
        %v963 = vld [vmem:[%s372 + $0x100] sm:$0xf]
        %v964 = vld [vmem:[%s372 + $0x104] sm:$0xff]
        %v965 = vld [vmem:[%s372 + $0x10c] sm:$0xff]
        %v966 = vld [vmem:[%s372 + $0x114] sm:$0xf]
        %v967 = vld [vmem:[%s372 + $0x118] sm:$0xff]
        %v968 = vld [vmem:[%s372 + $0x120] sm:$0xff]
        %v969 = vld [vmem:[%s372 + $0x128] sm:$0xf]
        %v970 = vld [vmem:[%s372 + $0x12c] sm:$0xff]
        %v971 = vld [vmem:[%s372 + $0x134] sm:$0xff]
        %v972 = vld [vmem:[%s372 + $0x13c] sm:$0xf]
        %v973 = vld [vmem:[%s372 + $0x140] sm:$0xff]
        %v974 = vld [vmem:[%s372 + $0x148] sm:$0xff]
        %v975 = vld [vmem:[%s372 + $0x150] sm:$0xf]
        %v976 = vld [vmem:[%s372 + $0x154] sm:$0xff]
        %v977 = vld [vmem:[%s372 + $0x15c] sm:$0xff]
        %v978 = vld [vmem:[%s372 + $0x164] sm:$0xf]
        %v979 = vld [vmem:[%s372 + $0x168] sm:$0xff]
        %v980 = vld [vmem:[%s372 + $0x170] sm:$0xff]
        %v981 = vld [vmem:[%s372 + $0x178] sm:$0xf]
        %v982 = vld [vmem:[%s372 + $0x17c] sm:$0xff]
        %v983 = vld [vmem:[%s372 + $0x184] sm:$0xff]
        %v984 = vld [vmem:[%s372 + $0x18c] sm:$0xf]
        %v985 = vld [vmem:[%s372 + $0x190] sm:$0xff]
        %v986 = vld [vmem:[%s372 + $0x198] sm:$0xff]
        %v987 = vld [vmem:[%s372 + $0x1a0] sm:$0xf]
        %v988 = vld [vmem:[%s372 + $0x1a4] sm:$0xff]
        %v989 = vld [vmem:[%s372 + $0x1ac] sm:$0xff]
        %v990 = vld [vmem:[%s372 + $0x1b4] sm:$0xf]
        %v991 = vld [vmem:[%s372 + $0x1b8] sm:$0xff]
        %v992 = vld [vmem:[%s372 + $0x1c0] sm:$0xff]
        %v993 = vld [vmem:[%s372 + $0x1c8] sm:$0xf]
        %v994 = vld [vmem:[%s372 + $0x1cc] sm:$0xff]
        %v995 = vld [vmem:[%s372 + $0x1d4] sm:$0xff]
        %v996 = vld [vmem:[%s372 + $0x1dc] sm:$0xf]
        %v997 = vld [vmem:[%s372 + $0x1e0] sm:$0xff]
        %v998 = vld [vmem:[%s372 + $0x1e8] sm:$0xff]
        %v999 = vld [vmem:[%s372 + $0x1f0] sm:$0xf]
        %v1000 = vld [vmem:[%s372 + $0x1f4] sm:$0xff]
        %v1001 = vld [vmem:[%s372 + $0x1fc] sm:$0xff]
        %v1002 = vld [vmem:[%s372 + $0x204] sm:$0xf]
        %v1003 = vld [vmem:[%s372 + $0x208] sm:$0xff]
        %v1004 = vld [vmem:[%s372 + $0x210] sm:$0xff]
        %v1005 = vld [vmem:[%s372 + $0x218] sm:$0xf]
        %v1006 = vld [vmem:[%s372 + $0x21c] sm:$0xff]
        %v1007 = vld [vmem:[%s372 + $0x224] sm:$0xff]
        %v1008 = vld [vmem:[%s372 + $0x22c] sm:$0xf]
        %v1009 = vld [vmem:[%s372 + $0x230] sm:$0xff]
        %v1010 = vld [vmem:[%s372 + $0x238] sm:$0xff]
        %v1011 = vld [vmem:[%s372 + $0x240] sm:$0xf]
        %v1012 = vld [vmem:[%s372 + $0x244] sm:$0xff]
        %v1013 = vld [vmem:[%s372 + $0x24c] sm:$0xff]
        %v1014 = vld [vmem:[%s372 + $0x254] sm:$0xf]
        %v1015 = vld [vmem:[%s372 + $0x258] sm:$0xff]
        %v1016 = vld [vmem:[%s372 + $0x260] sm:$0xff]
        %v1017 = vld [vmem:[%s372 + $0x268] sm:$0xf]
        %v1018 = vld [vmem:[%s372 + $0x26c] sm:$0xff]
        %v1019 = vld [vmem:[%s372 + $0x274] sm:$0xff]
        %v1020 = vld [vmem:[%s372 + $0x27c] sm:$0xf]
        %v1021 = vld [vmem:[%s372 + $0x280] sm:$0xff]
        %v1022 = vld [vmem:[%s372 + $0x288] sm:$0xff]
        %v1023 = vld [vmem:[%s372 + $0x290] sm:$0xf]
        %v1024 = vld [vmem:[%s372 + $0x294] sm:$0xff]
        %v1025 = vld [vmem:[%s372 + $0x29c] sm:$0xff]
        %v1026 = vld [vmem:[%s372 + $0x2a4] sm:$0xf]
        %v1027 = vld [vmem:[%s372 + $0x2a8] sm:$0xff]
        %v1028 = vld [vmem:[%s372 + $0x2b0] sm:$0xff]
        %v1029 = vld [vmem:[%s372 + $0x2b8] sm:$0xf]
        %v1030 = vld [vmem:[%s372 + $0x2bc] sm:$0xff]
        %v1031 = vld [vmem:[%s372 + $0x2c4] sm:$0xff]
        %v1032 = vld [vmem:[%s372 + $0x2cc] sm:$0xf]
        %v1033 = vld [vmem:[%s372 + $0x2d0] sm:$0xff]
        %v1034 = vld [vmem:[%s372 + $0x2d8] sm:$0xff]
        %v1035 = vld [vmem:[%s372 + $0x2e0] sm:$0xf]
        %v1036 = vld [vmem:[%s372 + $0x2e4] sm:$0xff]
        %v1037 = vld [vmem:[%s372 + $0x2ec] sm:$0xff]
        %v1038 = vld [vmem:[%s372 + $0x2f4] sm:$0xf]
        %v1039 = vld [vmem:[%s372 + $0x2f8] sm:$0xff]
        %v1040 = vld [vmem:[%s372 + $0x300] sm:$0xff]
        %v1041 = vld [vmem:[%s372 + $0x308] sm:$0xf]
        %v1042 = vld [vmem:[%s372 + $0x30c] sm:$0xff]
        %v1043 = vld [vmem:[%s372 + $0x314] sm:$0xff]
        %v1044 = vld [vmem:[%s372 + $0x31c] sm:$0xf]
        %v1045 = vld [vmem:[%s372 + $0x320] sm:$0xff]
        %v1046 = vld [vmem:[%s372 + $0x328] sm:$0xff]
        %v1047 = vld [vmem:[%s372 + $0x330] sm:$0xf]
        %v1048 = vld [vmem:[%s372 + $0x334] sm:$0xff]
        %v1049 = vld [vmem:[%s372 + $0x33c] sm:$0xff]
        %v1050 = vld [vmem:[%s372 + $0x344] sm:$0xf]
        %v1051 = vld [vmem:[%s372 + $0x348] sm:$0xff]
        %v1052 = vld [vmem:[%s372 + $0x350] sm:$0xff]
        %v1053 = vld [vmem:[%s372 + $0x358] sm:$0xf]
        %v1054 = vld [vmem:[%s372 + $0x35c] sm:$0xff]
        %v1055 = vld [vmem:[%s372 + $0x364] sm:$0xff]
        %v1056 = vld [vmem:[%s372 + $0x36c] sm:$0xf]
        %v1057 = vld [vmem:[%s372 + $0x370] sm:$0xff]
        %v1058 = vld [vmem:[%s372 + $0x378] sm:$0xff]
        %v1059 = vld [vmem:[%s372 + $0x380] sm:$0xf]
        %v1060 = vld [vmem:[%s372 + $0x384] sm:$0xff]
        %v1061 = vld [vmem:[%s372 + $0x38c] sm:$0xff]
        %v1062 = vld [vmem:[%s372 + $0x394] sm:$0xf]
        %v1063 = vld [vmem:[%s372 + $0x398] sm:$0xff]
        %v1064 = vld [vmem:[%s372 + $0x3a0] sm:$0xff]
        %v1065 = vld [vmem:[%s372 + $0x3a8] sm:$0xf]
        %v1066 = vld [vmem:[%s372 + $0x3ac] sm:$0xff]
        %v1067 = vld [vmem:[%s372 + $0x3b4] sm:$0xff]
        %v1068 = vld [vmem:[%s372 + $0x3bc] sm:$0xf]
        %v1069 = vld [vmem:[%s372 + $0x3c0] sm:$0xff]
        %v1070 = vld [vmem:[%s372 + $0x3c8] sm:$0xff]
        %v1071 = vld [vmem:[%s372 + $0x3d0] sm:$0xf]
        %v1072 = vld [vmem:[%s372 + $0x3d4] sm:$0xff]
        %v1073 = vld [vmem:[%s372 + $0x3dc] sm:$0xff]
        %v1074 = vld [vmem:[%s372 + $0x3e4] sm:$0xf]
        %v1075 = vld [vmem:[%s372 + $0x3e8] sm:$0xff]
        %v1076 = vld [vmem:[%s372 + $0x3f0] sm:$0xff]
        %v1077 = vld [vmem:[%s372 + $0x3f8] sm:$0xf]
        %v1078 = vld [vmem:[%s372 + $0x3fc] sm:$0xff]
        %v1079 = vld [vmem:[%s372 + $0x404] sm:$0xff]
        %v1080 = vld [vmem:[%s372 + $0x40c] sm:$0xf]
        %v1081 = vld [vmem:[%s372 + $0x410] sm:$0xff]
        %v1082 = vld [vmem:[%s372 + $0x418] sm:$0xff]
        %v1083 = vld [vmem:[%s372 + $0x420] sm:$0xf]
        %v1084 = vld [vmem:[%s372 + $0x424] sm:$0xff]
        %v1085 = vld [vmem:[%s372 + $0x42c] sm:$0xff]
        %v1086 = vld [vmem:[%s372 + $0x434] sm:$0xf]
        %v1087 = vld [vmem:[%s372 + $0x438] sm:$0xff]
        %v1088 = vld [vmem:[%s372 + $0x440] sm:$0xff]
        %v1089 = vld [vmem:[%s372 + $0x448] sm:$0xf]
        %v1090 = vld [vmem:[%s372 + $0x44c] sm:$0xff]
        %v1091 = vld [vmem:[%s372 + $0x454] sm:$0xff]
        %v1092 = vld [vmem:[%s372 + $0x45c] sm:$0xf]
        %v1093 = vld [vmem:[%s372 + $0x460] sm:$0xff]
        %v1094 = vld [vmem:[%s372 + $0x468] sm:$0xff]
        %v1095 = vld [vmem:[%s372 + $0x470] sm:$0xf]
        %v1096 = vld [vmem:[%s372 + $0x474] sm:$0xff]
        %v1097 = vld [vmem:[%s372 + $0x47c] sm:$0xff]
        %v1098 = vld [vmem:[%s372 + $0x484] sm:$0xf]
        %v1099 = vld [vmem:[%s372 + $0x488] sm:$0xff]
        %v1100 = vld [vmem:[%s372 + $0x490] sm:$0xff]
        %v1101 = vld [vmem:[%s372 + $0x498] sm:$0xf]
        %v1102 = vld [vmem:[%s372 + $0x49c] sm:$0xff]
        %v1103 = vld [vmem:[%s372 + $0x4a4] sm:$0xff]
        %v1104 = vld [vmem:[%s372 + $0x4ac] sm:$0xf]
        %v1105 = vld [vmem:[%s372 + $0x4b0] sm:$0xff]
        %v1106 = vld [vmem:[%s372 + $0x4b8] sm:$0xff]
        %v1107 = vld [vmem:[%s372 + $0x4c0] sm:$0xf]
        %v1108 = vld [vmem:[%s372 + $0x4c4] sm:$0xff]
        %v1109 = vld [vmem:[%s372 + $0x4cc] sm:$0xff]
        %v1110 = vld [vmem:[%s372 + $0x4d4] sm:$0xf]
        %v1111 = vld [vmem:[%s372 + $0x4d8] sm:$0xff]
        %v1112 = vld [vmem:[%s372 + $0x4e0] sm:$0xff]
        %v1113 = vld [vmem:[%s372 + $0x4e8] sm:$0xf]
        %v1114 = vld [vmem:[%s372 + $0x4ec] sm:$0xff]
        %v1115 = vld [vmem:[%s372 + $0x4f4] sm:$0xff]
        %v1116 = vld [vmem:[%s372 + $0x4fc] sm:$0xf]
        %v1117 = vld [vmem:[%s372 + $0x500] sm:$0xff]
        %v1118 = vld [vmem:[%s372 + $0x508] sm:$0xff]
        %v1119 = vld [vmem:[%s372 + $0x510] sm:$0xf]
        %v1120 = vld [vmem:[%s372 + $0x514] sm:$0xff]
        %v1121 = vld [vmem:[%s372 + $0x51c] sm:$0xff]
        %v1122 = vld [vmem:[%s372 + $0x524] sm:$0xf]
        %v1123 = vld [vmem:[%s372 + $0x528] sm:$0xff]
        %v1124 = vld [vmem:[%s372 + $0x530] sm:$0xff]
        %v1125 = vld [vmem:[%s372 + $0x538] sm:$0xf]
        %v1126 = vld [vmem:[%s372 + $0x53c] sm:$0xff]
        %v1127 = vld [vmem:[%s372 + $0x544] sm:$0xff]
        %v1128 = vld [vmem:[%s372 + $0x54c] sm:$0xf]
        %v1129 = vld [vmem:[%s372 + $0x550] sm:$0xff]
        %v1130 = vld [vmem:[%s372 + $0x558] sm:$0xff]
        %v1131 = vld [vmem:[%s372 + $0x560] sm:$0xf]
        %v1132 = vld [vmem:[%s372 + $0x564] sm:$0xff]
        %v1133 = vld [vmem:[%s372 + $0x56c] sm:$0xff]
        %v1134 = vld [vmem:[%s372 + $0x574] sm:$0xf]
        %v1135 = vld [vmem:[%s372 + $0x578] sm:$0xff]
        %v1136 = vld [vmem:[%s372 + $0x580] sm:$0xff]
        %v1137 = vld [vmem:[%s372 + $0x588] sm:$0xf]
        %v1138 = vld [vmem:[%s372 + $0x58c] sm:$0xff]
        %v1139 = vld [vmem:[%s372 + $0x594] sm:$0xff]
        %v1140 = vld [vmem:[%s372 + $0x59c] sm:$0xf]
        %v1141 = vld [vmem:[%s372 + $0x5a0] sm:$0xff]
        %v1142 = vld [vmem:[%s372 + $0x5a8] sm:$0xff]
        %v1143 = vld [vmem:[%s372 + $0x5b0] sm:$0xf]
        %v1144 = vld [vmem:[%s372 + $0x5b4] sm:$0xff]
        %v1145 = vld [vmem:[%s372 + $0x5bc] sm:$0xff]
        %v1146 = vld [vmem:[%s372 + $0x5c4] sm:$0xf]
        %v1147 = vld [vmem:[%s372 + $0x5c8] sm:$0xff]
        %v1148 = vld [vmem:[%s372 + $0x5d0] sm:$0xff]
        %v1149 = vld [vmem:[%s372 + $0x5d8] sm:$0xf]
        %v1150 = vld [vmem:[%s372 + $0x5dc] sm:$0xff]
        %v1151 = vld [vmem:[%s372 + $0x5e4] sm:$0xff]
        %v1152 = vld [vmem:[%s372 + $0x5ec] sm:$0xf]
        %v1153 = vld [vmem:[%s372 + $0x5f0] sm:$0xff]
        %v1154 = vld [vmem:[%s372 + $0x5f8] sm:$0xff]
        %v1155 = vld [vmem:[%s372 + $0x600] sm:$0xf]
        %v1156 = vld [vmem:[%s372 + $0x604] sm:$0xff]
        %v1157 = vld [vmem:[%s372 + $0x60c] sm:$0xff]
        %v1158 = vld [vmem:[%s372 + $0x614] sm:$0xf]
        %v1159 = vld [vmem:[%s372 + $0x618] sm:$0xff]
        %v1160 = vld [vmem:[%s372 + $0x620] sm:$0xff]
        %v1161 = vld [vmem:[%s372 + $0x628] sm:$0xf]
        %v1162 = vld [vmem:[%s372 + $0x62c] sm:$0xff]
        %v1163 = vld [vmem:[%s372 + $0x634] sm:$0xff]
        %v1164 = vld [vmem:[%s372 + $0x63c] sm:$0xf]
        %v1165 = vld [vmem:[%s372 + $0x640] sm:$0xff]
        %v1166 = vld [vmem:[%s372 + $0x648] sm:$0xff]
        %v1167 = vld [vmem:[%s372 + $0x650] sm:$0xf]
        %v1168 = vld [vmem:[%s372 + $0x654] sm:$0xff]
        %v1169 = vld [vmem:[%s372 + $0x65c] sm:$0xff]
        %v1170 = vld [vmem:[%s372 + $0x664] sm:$0xf]
        %v1171 = vld [vmem:[%s372 + $0x668] sm:$0xff]
        %v1172 = vld [vmem:[%s372 + $0x670] sm:$0xff]
        %v1173 = vld [vmem:[%s372 + $0x678] sm:$0xf]
        %v1174 = vld [vmem:[%s372 + $0x67c] sm:$0xff]
        %v1175 = vld [vmem:[%s372 + $0x684] sm:$0xff]
        %v1176 = vld [vmem:[%s372 + $0x68c] sm:$0xf]
        %v1177 = vld [vmem:[%s372 + $0x690] sm:$0xff]
        %v1178 = vld [vmem:[%s372 + $0x698] sm:$0xff]
        %v1179 = vld [vmem:[%s372 + $0x6a0] sm:$0xf]
        %v1180 = vld [vmem:[%s372 + $0x6a4] sm:$0xff]
        %v1181 = vld [vmem:[%s372 + $0x6ac] sm:$0xff]
        %v1182 = vld [vmem:[%s372 + $0x6b4] sm:$0xf]
        %v1183 = vld [vmem:[%s372 + $0x6b8] sm:$0xff]
        %v1184 = vld [vmem:[%s372 + $0x6c0] sm:$0xff]
        %v1185 = vld [vmem:[%s372 + $0x6c8] sm:$0xf]
        %v1186 = vld [vmem:[%s372 + $0x6cc] sm:$0xff]
        %v1187 = vld [vmem:[%s372 + $0x6d4] sm:$0xff]
        %v1188 = vld [vmem:[%s372 + $0x6dc] sm:$0xf]
        %v1189 = vld [vmem:[%s372 + $0x6e0] sm:$0xff]
        %v1190 = vld [vmem:[%s372 + $0x6e8] sm:$0xff]
        %v1191 = vld [vmem:[%s372 + $0x6f0] sm:$0xf]
        %v1192 = vld [vmem:[%s372 + $0x6f4] sm:$0xff]
        %v1193 = vld [vmem:[%s372 + $0x6fc] sm:$0xff]
        %v1194 = vld [vmem:[%s372 + $0x704] sm:$0xf]
        %v1195 = vld [vmem:[%s372 + $0x708] sm:$0xff]
        %v1196 = vld [vmem:[%s372 + $0x710] sm:$0xff]
        %v1197 = vld [vmem:[%s372 + $0x718] sm:$0xf]
        %v1198 = vld [vmem:[%s372 + $0x71c] sm:$0xff]
        %v1199 = vld [vmem:[%s372 + $0x724] sm:$0xff]
        %v1200 = vld [vmem:[%s372 + $0x72c] sm:$0xf]
        %v1201 = vld [vmem:[%s372 + $0x730] sm:$0xff]
        %v1202 = vld [vmem:[%s372 + $0x738] sm:$0xff]
        %v1203 = vld [vmem:[%s372 + $0x740] sm:$0xf]
        %v1204 = vld [vmem:[%s372 + $0x744] sm:$0xff]
        %v1205 = vld [vmem:[%s372 + $0x74c] sm:$0xff]
        %v1206 = vld [vmem:[%s372 + $0x754] sm:$0xf]
        %v1207 = vld [vmem:[%s372 + $0x758] sm:$0xff]
        %v1208 = vld [vmem:[%s372 + $0x760] sm:$0xff]
        %v1209 = vld [vmem:[%s372 + $0x768] sm:$0xf]
        %v1210 = vld [vmem:[%s372 + $0x76c] sm:$0xff]
        %v1211 = vld [vmem:[%s372 + $0x774] sm:$0xff]
        %v1212 = vld [vmem:[%s372 + $0x77c] sm:$0xf]
        %v1213 = vunpack.c.l.bf16 %v925
        %v1214 = vunpack.c.h.bf16 %v925
        %v1215 = vunpack.c.l.bf16 %v926
        %v1216 = vunpack.c.h.bf16 %v926
        %v1217 = vunpack.c.l.bf16 %v927
        %v1218 = vunpack.c.l.bf16 %v928
        %v1219 = vunpack.c.h.bf16 %v928
        %v1220 = vunpack.c.l.bf16 %v929
        %v1221 = vunpack.c.h.bf16 %v929
        %v1222 = vunpack.c.l.bf16 %v930
        %v1223 = vunpack.c.l.bf16 %v931
        %v1224 = vunpack.c.h.bf16 %v931
        %v1225 = vunpack.c.l.bf16 %v932
        %v1226 = vunpack.c.h.bf16 %v932
        %v1227 = vunpack.c.l.bf16 %v933
        %v1228 = vunpack.c.l.bf16 %v934
        %v1229 = vunpack.c.h.bf16 %v934
        %v1230 = vunpack.c.l.bf16 %v935
        %v1231 = vunpack.c.h.bf16 %v935
        %v1232 = vunpack.c.l.bf16 %v936
        %v1233 = vunpack.c.l.bf16 %v937
        %v1234 = vunpack.c.h.bf16 %v937
        %v1235 = vunpack.c.l.bf16 %v938
        %v1236 = vunpack.c.h.bf16 %v938
        %v1237 = vunpack.c.l.bf16 %v939
        %v1238 = vunpack.c.l.bf16 %v940
        %v1239 = vunpack.c.h.bf16 %v940
        %v1240 = vunpack.c.l.bf16 %v941
        %v1241 = vunpack.c.h.bf16 %v941
        %v1242 = vunpack.c.l.bf16 %v942
        %v1243 = vunpack.c.l.bf16 %v943
        %v1244 = vunpack.c.h.bf16 %v943
        %v1245 = vunpack.c.l.bf16 %v944
        %v1246 = vunpack.c.h.bf16 %v944
        %v1247 = vunpack.c.l.bf16 %v945
        %v1248 = vunpack.c.l.bf16 %v946
        %v1249 = vunpack.c.h.bf16 %v946
        %v1250 = vunpack.c.l.bf16 %v947
        %v1251 = vunpack.c.h.bf16 %v947
        %v1252 = vunpack.c.l.bf16 %v948
        %v1253 = vunpack.c.l.bf16 %v949
        %v1254 = vunpack.c.h.bf16 %v949
        %v1255 = vunpack.c.l.bf16 %v950
        %v1256 = vunpack.c.h.bf16 %v950
        %v1257 = vunpack.c.l.bf16 %v951
        %v1258 = vunpack.c.l.bf16 %v952
        %v1259 = vunpack.c.h.bf16 %v952
        %v1260 = vunpack.c.l.bf16 %v953
        %v1261 = vunpack.c.h.bf16 %v953
        %v1262 = vunpack.c.l.bf16 %v954
        %v1263 = vunpack.c.l.bf16 %v955
        %v1264 = vunpack.c.h.bf16 %v955
        %v1265 = vunpack.c.l.bf16 %v956
        %v1266 = vunpack.c.h.bf16 %v956
        %v1267 = vunpack.c.l.bf16 %v957
        %v1268 = vunpack.c.l.bf16 %v958
        %v1269 = vunpack.c.h.bf16 %v958
        %v1270 = vunpack.c.l.bf16 %v959
        %v1271 = vunpack.c.h.bf16 %v959
        %v1272 = vunpack.c.l.bf16 %v960
        %v1273 = vunpack.c.l.bf16 %v961
        %v1274 = vunpack.c.h.bf16 %v961
        %v1275 = vunpack.c.l.bf16 %v962
        %v1276 = vunpack.c.h.bf16 %v962
        %v1277 = vunpack.c.l.bf16 %v963
        %v1278 = vunpack.c.l.bf16 %v964
        %v1279 = vunpack.c.h.bf16 %v964
        %v1280 = vunpack.c.l.bf16 %v965
        %v1281 = vunpack.c.h.bf16 %v965
        %v1282 = vunpack.c.l.bf16 %v966
        %v1283 = vunpack.c.l.bf16 %v967
        %v1284 = vunpack.c.h.bf16 %v967
        %v1285 = vunpack.c.l.bf16 %v968
        %v1286 = vunpack.c.h.bf16 %v968
        %v1287 = vunpack.c.l.bf16 %v969
        %v1288 = vunpack.c.l.bf16 %v970
        %v1289 = vunpack.c.h.bf16 %v970
        %v1290 = vunpack.c.l.bf16 %v971
        %v1291 = vunpack.c.h.bf16 %v971
        %v1292 = vunpack.c.l.bf16 %v972
        %v1293 = vunpack.c.l.bf16 %v973
        %v1294 = vunpack.c.h.bf16 %v973
        %v1295 = vunpack.c.l.bf16 %v974
        %v1296 = vunpack.c.h.bf16 %v974
        %v1297 = vunpack.c.l.bf16 %v975
        %v1298 = vunpack.c.l.bf16 %v976
        %v1299 = vunpack.c.h.bf16 %v976
        %v1300 = vunpack.c.l.bf16 %v977
        %v1301 = vunpack.c.h.bf16 %v977
        %v1302 = vunpack.c.l.bf16 %v978
        %v1303 = vunpack.c.l.bf16 %v979
        %v1304 = vunpack.c.h.bf16 %v979
        %v1305 = vunpack.c.l.bf16 %v980
        %v1306 = vunpack.c.h.bf16 %v980
        %v1307 = vunpack.c.l.bf16 %v981
        %v1308 = vunpack.c.l.bf16 %v982
        %v1309 = vunpack.c.h.bf16 %v982
        %v1310 = vunpack.c.l.bf16 %v983
        %v1311 = vunpack.c.h.bf16 %v983
        %v1312 = vunpack.c.l.bf16 %v984
        %v1313 = vunpack.c.l.bf16 %v985
        %v1314 = vunpack.c.h.bf16 %v985
        %v1315 = vunpack.c.l.bf16 %v986
        %v1316 = vunpack.c.h.bf16 %v986
        %v1317 = vunpack.c.l.bf16 %v987
        %v1318 = vunpack.c.l.bf16 %v988
        %v1319 = vunpack.c.h.bf16 %v988
        %v1320 = vunpack.c.l.bf16 %v989
        %v1321 = vunpack.c.h.bf16 %v989
        %v1322 = vunpack.c.l.bf16 %v990
        %v1323 = vunpack.c.l.bf16 %v991
        %v1324 = vunpack.c.h.bf16 %v991
        %v1325 = vunpack.c.l.bf16 %v992
        %v1326 = vunpack.c.h.bf16 %v992
        %v1327 = vunpack.c.l.bf16 %v993
        %v1328 = vunpack.c.l.bf16 %v994
        %v1329 = vunpack.c.h.bf16 %v994
        %v1330 = vunpack.c.l.bf16 %v995
        %v1331 = vunpack.c.h.bf16 %v995
        %v1332 = vunpack.c.l.bf16 %v996
        %v1333 = vunpack.c.l.bf16 %v997
        %v1334 = vunpack.c.h.bf16 %v997
        %v1335 = vunpack.c.l.bf16 %v998
        %v1336 = vunpack.c.h.bf16 %v998
        %v1337 = vunpack.c.l.bf16 %v999
        %v1338 = vunpack.c.l.bf16 %v1000
        %v1339 = vunpack.c.h.bf16 %v1000
        %v1340 = vunpack.c.l.bf16 %v1001
        %v1341 = vunpack.c.h.bf16 %v1001
        %v1342 = vunpack.c.l.bf16 %v1002
        %v1343 = vunpack.c.l.bf16 %v1003
        %v1344 = vunpack.c.h.bf16 %v1003
        %v1345 = vunpack.c.l.bf16 %v1004
        %v1346 = vunpack.c.h.bf16 %v1004
        %v1347 = vunpack.c.l.bf16 %v1005
        %v1348 = vunpack.c.l.bf16 %v1006
        %v1349 = vunpack.c.h.bf16 %v1006
        %v1350 = vunpack.c.l.bf16 %v1007
        %v1351 = vunpack.c.h.bf16 %v1007
        %v1352 = vunpack.c.l.bf16 %v1008
        %v1353 = vunpack.c.l.bf16 %v1009
        %v1354 = vunpack.c.h.bf16 %v1009
        %v1355 = vunpack.c.l.bf16 %v1010
        %v1356 = vunpack.c.h.bf16 %v1010
        %v1357 = vunpack.c.l.bf16 %v1011
        %v1358 = vunpack.c.l.bf16 %v1012
        %v1359 = vunpack.c.h.bf16 %v1012
        %v1360 = vunpack.c.l.bf16 %v1013
        %v1361 = vunpack.c.h.bf16 %v1013
        %v1362 = vunpack.c.l.bf16 %v1014
        %v1363 = vunpack.c.l.bf16 %v1015
        %v1364 = vunpack.c.h.bf16 %v1015
        %v1365 = vunpack.c.l.bf16 %v1016
        %v1366 = vunpack.c.h.bf16 %v1016
        %v1367 = vunpack.c.l.bf16 %v1017
        %v1368 = vunpack.c.l.bf16 %v1018
        %v1369 = vunpack.c.h.bf16 %v1018
        %v1370 = vunpack.c.l.bf16 %v1019
        %v1371 = vunpack.c.h.bf16 %v1019
        %v1372 = vunpack.c.l.bf16 %v1020
        %v1373 = vunpack.c.l.bf16 %v1021
        %v1374 = vunpack.c.h.bf16 %v1021
        %v1375 = vunpack.c.l.bf16 %v1022
        %v1376 = vunpack.c.h.bf16 %v1022
        %v1377 = vunpack.c.l.bf16 %v1023
        %v1378 = vunpack.c.l.bf16 %v1024
        %v1379 = vunpack.c.h.bf16 %v1024
        %v1380 = vunpack.c.l.bf16 %v1025
        %v1381 = vunpack.c.h.bf16 %v1025
        %v1382 = vunpack.c.l.bf16 %v1026
        %v1383 = vunpack.c.l.bf16 %v1027
        %v1384 = vunpack.c.h.bf16 %v1027
        %v1385 = vunpack.c.l.bf16 %v1028
        %v1386 = vunpack.c.h.bf16 %v1028
        %v1387 = vunpack.c.l.bf16 %v1029
        %v1388 = vunpack.c.l.bf16 %v1030
        %v1389 = vunpack.c.h.bf16 %v1030
        %v1390 = vunpack.c.l.bf16 %v1031
        %v1391 = vunpack.c.h.bf16 %v1031
        %v1392 = vunpack.c.l.bf16 %v1032
        %v1393 = vunpack.c.l.bf16 %v1033
        %v1394 = vunpack.c.h.bf16 %v1033
        %v1395 = vunpack.c.l.bf16 %v1034
        %v1396 = vunpack.c.h.bf16 %v1034
        %v1397 = vunpack.c.l.bf16 %v1035
        %v1398 = vunpack.c.l.bf16 %v1036
        %v1399 = vunpack.c.h.bf16 %v1036
        %v1400 = vunpack.c.l.bf16 %v1037
        %v1401 = vunpack.c.h.bf16 %v1037
        %v1402 = vunpack.c.l.bf16 %v1038
        %v1403 = vunpack.c.l.bf16 %v1039
        %v1404 = vunpack.c.h.bf16 %v1039
        %v1405 = vunpack.c.l.bf16 %v1040
        %v1406 = vunpack.c.h.bf16 %v1040
        %v1407 = vunpack.c.l.bf16 %v1041
        %v1408 = vunpack.c.l.bf16 %v1042
        %v1409 = vunpack.c.h.bf16 %v1042
        %v1410 = vunpack.c.l.bf16 %v1043
        %v1411 = vunpack.c.h.bf16 %v1043
        %v1412 = vunpack.c.l.bf16 %v1044
        %v1413 = vunpack.c.l.bf16 %v1045
        %v1414 = vunpack.c.h.bf16 %v1045
        %v1415 = vunpack.c.l.bf16 %v1046
        %v1416 = vunpack.c.h.bf16 %v1046
        %v1417 = vunpack.c.l.bf16 %v1047
        %v1418 = vunpack.c.l.bf16 %v1048
        %v1419 = vunpack.c.h.bf16 %v1048
        %v1420 = vunpack.c.l.bf16 %v1049
        %v1421 = vunpack.c.h.bf16 %v1049
        %v1422 = vunpack.c.l.bf16 %v1050
        %v1423 = vunpack.c.l.bf16 %v1051
        %v1424 = vunpack.c.h.bf16 %v1051
        %v1425 = vunpack.c.l.bf16 %v1052
        %v1426 = vunpack.c.h.bf16 %v1052
        %v1427 = vunpack.c.l.bf16 %v1053
        %v1428 = vunpack.c.l.bf16 %v1054
        %v1429 = vunpack.c.h.bf16 %v1054
        %v1430 = vunpack.c.l.bf16 %v1055
        %v1431 = vunpack.c.h.bf16 %v1055
        %v1432 = vunpack.c.l.bf16 %v1056
        %v1433 = vunpack.c.l.bf16 %v1057
        %v1434 = vunpack.c.h.bf16 %v1057
        %v1435 = vunpack.c.l.bf16 %v1058
        %v1436 = vunpack.c.h.bf16 %v1058
        %v1437 = vunpack.c.l.bf16 %v1059
        %v1438 = vunpack.c.l.bf16 %v1060
        %v1439 = vunpack.c.h.bf16 %v1060
        %v1440 = vunpack.c.l.bf16 %v1061
        %v1441 = vunpack.c.h.bf16 %v1061
        %v1442 = vunpack.c.l.bf16 %v1062
        %v1443 = vunpack.c.l.bf16 %v1063
        %v1444 = vunpack.c.h.bf16 %v1063
        %v1445 = vunpack.c.l.bf16 %v1064
        %v1446 = vunpack.c.h.bf16 %v1064
        %v1447 = vunpack.c.l.bf16 %v1065
        %v1448 = vunpack.c.l.bf16 %v1066
        %v1449 = vunpack.c.h.bf16 %v1066
        %v1450 = vunpack.c.l.bf16 %v1067
        %v1451 = vunpack.c.h.bf16 %v1067
        %v1452 = vunpack.c.l.bf16 %v1068
        %v1453 = vunpack.c.l.bf16 %v1069
        %v1454 = vunpack.c.h.bf16 %v1069
        %v1455 = vunpack.c.l.bf16 %v1070
        %v1456 = vunpack.c.h.bf16 %v1070
        %v1457 = vunpack.c.l.bf16 %v1071
        %v1458 = vunpack.c.l.bf16 %v1072
        %v1459 = vunpack.c.h.bf16 %v1072
        %v1460 = vunpack.c.l.bf16 %v1073
        %v1461 = vunpack.c.h.bf16 %v1073
        %v1462 = vunpack.c.l.bf16 %v1074
        %v1463 = vunpack.c.l.bf16 %v1075
        %v1464 = vunpack.c.h.bf16 %v1075
        %v1465 = vunpack.c.l.bf16 %v1076
        %v1466 = vunpack.c.h.bf16 %v1076
        %v1467 = vunpack.c.l.bf16 %v1077
        %v1468 = vunpack.c.l.bf16 %v1078
        %v1469 = vunpack.c.h.bf16 %v1078
        %v1470 = vunpack.c.l.bf16 %v1079
        %v1471 = vunpack.c.h.bf16 %v1079
        %v1472 = vunpack.c.l.bf16 %v1080
        %v1473 = vunpack.c.l.bf16 %v1081
        %v1474 = vunpack.c.h.bf16 %v1081
        %v1475 = vunpack.c.l.bf16 %v1082
        %v1476 = vunpack.c.h.bf16 %v1082
        %v1477 = vunpack.c.l.bf16 %v1083
        %v1478 = vunpack.c.l.bf16 %v1084
        %v1479 = vunpack.c.h.bf16 %v1084
        %v1480 = vunpack.c.l.bf16 %v1085
        %v1481 = vunpack.c.h.bf16 %v1085
        %v1482 = vunpack.c.l.bf16 %v1086
        %v1483 = vunpack.c.l.bf16 %v1087
        %v1484 = vunpack.c.h.bf16 %v1087
        %v1485 = vunpack.c.l.bf16 %v1088
        %v1486 = vunpack.c.h.bf16 %v1088
        %v1487 = vunpack.c.l.bf16 %v1089
        %v1488 = vunpack.c.l.bf16 %v1090
        %v1489 = vunpack.c.h.bf16 %v1090
        %v1490 = vunpack.c.l.bf16 %v1091
        %v1491 = vunpack.c.h.bf16 %v1091
        %v1492 = vunpack.c.l.bf16 %v1092
        %v1493 = vunpack.c.l.bf16 %v1093
        %v1494 = vunpack.c.h.bf16 %v1093
        %v1495 = vunpack.c.l.bf16 %v1094
        %v1496 = vunpack.c.h.bf16 %v1094
        %v1497 = vunpack.c.l.bf16 %v1095
        %v1498 = vunpack.c.l.bf16 %v1096
        %v1499 = vunpack.c.h.bf16 %v1096
        %v1500 = vunpack.c.l.bf16 %v1097
        %v1501 = vunpack.c.h.bf16 %v1097
        %v1502 = vunpack.c.l.bf16 %v1098
        %v1503 = vunpack.c.l.bf16 %v1099
        %v1504 = vunpack.c.h.bf16 %v1099
        %v1505 = vunpack.c.l.bf16 %v1100
        %v1506 = vunpack.c.h.bf16 %v1100
        %v1507 = vunpack.c.l.bf16 %v1101
        %v1508 = vunpack.c.l.bf16 %v1102
        %v1509 = vunpack.c.h.bf16 %v1102
        %v1510 = vunpack.c.l.bf16 %v1103
        %v1511 = vunpack.c.h.bf16 %v1103
        %v1512 = vunpack.c.l.bf16 %v1104
        %v1513 = vunpack.c.l.bf16 %v1105
        %v1514 = vunpack.c.h.bf16 %v1105
        %v1515 = vunpack.c.l.bf16 %v1106
        %v1516 = vunpack.c.h.bf16 %v1106
        %v1517 = vunpack.c.l.bf16 %v1107
        %v1518 = vunpack.c.l.bf16 %v1108
        %v1519 = vunpack.c.h.bf16 %v1108
        %v1520 = vunpack.c.l.bf16 %v1109
        %v1521 = vunpack.c.h.bf16 %v1109
        %v1522 = vunpack.c.l.bf16 %v1110
        %v1523 = vunpack.c.l.bf16 %v1111
        %v1524 = vunpack.c.h.bf16 %v1111
        %v1525 = vunpack.c.l.bf16 %v1112
        %v1526 = vunpack.c.h.bf16 %v1112
        %v1527 = vunpack.c.l.bf16 %v1113
        %v1528 = vunpack.c.l.bf16 %v1114
        %v1529 = vunpack.c.h.bf16 %v1114
        %v1530 = vunpack.c.l.bf16 %v1115
        %v1531 = vunpack.c.h.bf16 %v1115
        %v1532 = vunpack.c.l.bf16 %v1116
        %v1533 = vunpack.c.l.bf16 %v1117
        %v1534 = vunpack.c.h.bf16 %v1117
        %v1535 = vunpack.c.l.bf16 %v1118
        %v1536 = vunpack.c.h.bf16 %v1118
        %v1537 = vunpack.c.l.bf16 %v1119
        %v1538 = vunpack.c.l.bf16 %v1120
        %v1539 = vunpack.c.h.bf16 %v1120
        %v1540 = vunpack.c.l.bf16 %v1121
        %v1541 = vunpack.c.h.bf16 %v1121
        %v1542 = vunpack.c.l.bf16 %v1122
        %v1543 = vunpack.c.l.bf16 %v1123
        %v1544 = vunpack.c.h.bf16 %v1123
        %v1545 = vunpack.c.l.bf16 %v1124
        %v1546 = vunpack.c.h.bf16 %v1124
        %v1547 = vunpack.c.l.bf16 %v1125
        %v1548 = vunpack.c.l.bf16 %v1126
        %v1549 = vunpack.c.h.bf16 %v1126
        %v1550 = vunpack.c.l.bf16 %v1127
        %v1551 = vunpack.c.h.bf16 %v1127
        %v1552 = vunpack.c.l.bf16 %v1128
        %v1553 = vunpack.c.l.bf16 %v1129
        %v1554 = vunpack.c.h.bf16 %v1129
        %v1555 = vunpack.c.l.bf16 %v1130
        %v1556 = vunpack.c.h.bf16 %v1130
        %v1557 = vunpack.c.l.bf16 %v1131
        %v1558 = vunpack.c.l.bf16 %v1132
        %v1559 = vunpack.c.h.bf16 %v1132
        %v1560 = vunpack.c.l.bf16 %v1133
        %v1561 = vunpack.c.h.bf16 %v1133
        %v1562 = vunpack.c.l.bf16 %v1134
        %v1563 = vunpack.c.l.bf16 %v1135
        %v1564 = vunpack.c.h.bf16 %v1135
        %v1565 = vunpack.c.l.bf16 %v1136
        %v1566 = vunpack.c.h.bf16 %v1136
        %v1567 = vunpack.c.l.bf16 %v1137
        %v1568 = vunpack.c.l.bf16 %v1138
        %v1569 = vunpack.c.h.bf16 %v1138
        %v1570 = vunpack.c.l.bf16 %v1139
        %v1571 = vunpack.c.h.bf16 %v1139
        %v1572 = vunpack.c.l.bf16 %v1140
        %v1573 = vunpack.c.l.bf16 %v1141
        %v1574 = vunpack.c.h.bf16 %v1141
        %v1575 = vunpack.c.l.bf16 %v1142
        %v1576 = vunpack.c.h.bf16 %v1142
        %v1577 = vunpack.c.l.bf16 %v1143
        %v1578 = vunpack.c.l.bf16 %v1144
        %v1579 = vunpack.c.h.bf16 %v1144
        %v1580 = vunpack.c.l.bf16 %v1145
        %v1581 = vunpack.c.h.bf16 %v1145
        %v1582 = vunpack.c.l.bf16 %v1146
        %v1583 = vunpack.c.l.bf16 %v1147
        %v1584 = vunpack.c.h.bf16 %v1147
        %v1585 = vunpack.c.l.bf16 %v1148
        %v1586 = vunpack.c.h.bf16 %v1148
        %v1587 = vunpack.c.l.bf16 %v1149
        %v1588 = vunpack.c.l.bf16 %v1150
        %v1589 = vunpack.c.h.bf16 %v1150
        %v1590 = vunpack.c.l.bf16 %v1151
        %v1591 = vunpack.c.h.bf16 %v1151
        %v1592 = vunpack.c.l.bf16 %v1152
        %v1593 = vunpack.c.l.bf16 %v1153
        %v1594 = vunpack.c.h.bf16 %v1153
        %v1595 = vunpack.c.l.bf16 %v1154
        %v1596 = vunpack.c.h.bf16 %v1154
        %v1597 = vunpack.c.l.bf16 %v1155
        %v1598 = vunpack.c.l.bf16 %v1156
        %v1599 = vunpack.c.h.bf16 %v1156
        %v1600 = vunpack.c.l.bf16 %v1157
        %v1601 = vunpack.c.h.bf16 %v1157
        %v1602 = vunpack.c.l.bf16 %v1158
        %v1603 = vunpack.c.l.bf16 %v1159
        %v1604 = vunpack.c.h.bf16 %v1159
        %v1605 = vunpack.c.l.bf16 %v1160
        %v1606 = vunpack.c.h.bf16 %v1160
        %v1607 = vunpack.c.l.bf16 %v1161
        %v1608 = vunpack.c.l.bf16 %v1162
        %v1609 = vunpack.c.h.bf16 %v1162
        %v1610 = vunpack.c.l.bf16 %v1163
        %v1611 = vunpack.c.h.bf16 %v1163
        %v1612 = vunpack.c.l.bf16 %v1164
        %v1613 = vunpack.c.l.bf16 %v1165
        %v1614 = vunpack.c.h.bf16 %v1165
        %v1615 = vunpack.c.l.bf16 %v1166
        %v1616 = vunpack.c.h.bf16 %v1166
        %v1617 = vunpack.c.l.bf16 %v1167
        %v1618 = vunpack.c.l.bf16 %v1168
        %v1619 = vunpack.c.h.bf16 %v1168
        %v1620 = vunpack.c.l.bf16 %v1169
        %v1621 = vunpack.c.h.bf16 %v1169
        %v1622 = vunpack.c.l.bf16 %v1170
        %v1623 = vunpack.c.l.bf16 %v1171
        %v1624 = vunpack.c.h.bf16 %v1171
        %v1625 = vunpack.c.l.bf16 %v1172
        %v1626 = vunpack.c.h.bf16 %v1172
        %v1627 = vunpack.c.l.bf16 %v1173
        %v1628 = vunpack.c.l.bf16 %v1174
        %v1629 = vunpack.c.h.bf16 %v1174
        %v1630 = vunpack.c.l.bf16 %v1175
        %v1631 = vunpack.c.h.bf16 %v1175
        %v1632 = vunpack.c.l.bf16 %v1176
        %v1633 = vunpack.c.l.bf16 %v1177
        %v1634 = vunpack.c.h.bf16 %v1177
        %v1635 = vunpack.c.l.bf16 %v1178
        %v1636 = vunpack.c.h.bf16 %v1178
        %v1637 = vunpack.c.l.bf16 %v1179
        %v1638 = vunpack.c.l.bf16 %v1180
        %v1639 = vunpack.c.h.bf16 %v1180
        %v1640 = vunpack.c.l.bf16 %v1181
        %v1641 = vunpack.c.h.bf16 %v1181
        %v1642 = vunpack.c.l.bf16 %v1182
        %v1643 = vunpack.c.l.bf16 %v1183
        %v1644 = vunpack.c.h.bf16 %v1183
        %v1645 = vunpack.c.l.bf16 %v1184
        %v1646 = vunpack.c.h.bf16 %v1184
        %v1647 = vunpack.c.l.bf16 %v1185
        %v1648 = vunpack.c.l.bf16 %v1186
        %v1649 = vunpack.c.h.bf16 %v1186
        %v1650 = vunpack.c.l.bf16 %v1187
        %v1651 = vunpack.c.h.bf16 %v1187
        %v1652 = vunpack.c.l.bf16 %v1188
        %v1653 = vunpack.c.l.bf16 %v1189
        %v1654 = vunpack.c.h.bf16 %v1189
        %v1655 = vunpack.c.l.bf16 %v1190
        %v1656 = vunpack.c.h.bf16 %v1190
        %v1657 = vunpack.c.l.bf16 %v1191
        %v1658 = vunpack.c.l.bf16 %v1192
        %v1659 = vunpack.c.h.bf16 %v1192
        %v1660 = vunpack.c.l.bf16 %v1193
        %v1661 = vunpack.c.h.bf16 %v1193
        %v1662 = vunpack.c.l.bf16 %v1194
        %v1663 = vunpack.c.l.bf16 %v1195
        %v1664 = vunpack.c.h.bf16 %v1195
        %v1665 = vunpack.c.l.bf16 %v1196
        %v1666 = vunpack.c.h.bf16 %v1196
        %v1667 = vunpack.c.l.bf16 %v1197
        %v1668 = vunpack.c.l.bf16 %v1198
        %v1669 = vunpack.c.h.bf16 %v1198
        %v1670 = vunpack.c.l.bf16 %v1199
        %v1671 = vunpack.c.h.bf16 %v1199
        %v1672 = vunpack.c.l.bf16 %v1200
        %v1673 = vunpack.c.l.bf16 %v1201
        %v1674 = vunpack.c.h.bf16 %v1201
        %v1675 = vunpack.c.l.bf16 %v1202
        %v1676 = vunpack.c.h.bf16 %v1202
        %v1677 = vunpack.c.l.bf16 %v1203
        %v1678 = vunpack.c.l.bf16 %v1204
        %v1679 = vunpack.c.h.bf16 %v1204
        %v1680 = vunpack.c.l.bf16 %v1205
        %v1681 = vunpack.c.h.bf16 %v1205
        %v1682 = vunpack.c.l.bf16 %v1206
        %v1683 = vunpack.c.l.bf16 %v1207
        %v1684 = vunpack.c.h.bf16 %v1207
        %v1685 = vunpack.c.l.bf16 %v1208
        %v1686 = vunpack.c.h.bf16 %v1208
        %v1687 = vunpack.c.l.bf16 %v1209
        %v1688 = vunpack.c.l.bf16 %v1210
        %v1689 = vunpack.c.h.bf16 %v1210
        %v1690 = vunpack.c.l.bf16 %v1211
        %v1691 = vunpack.c.h.bf16 %v1211
        %v1692 = vunpack.c.l.bf16 %v1212
        %v1693 = vld [vmem:[%s381] sm:$0x1f]
        %v1695 = vlaneseq
        %v1696 = vshrl.u32 %v1695, 7
        %v1697 = vsub.s32 0, %v1696
        %v1698 = vrot.slane %v1693, %v1697
        %v1699 = vlaneseq
        %v1700 = vshrl.u32 %v1699, 7
        %v1701 = vsub.s32 1, %v1700
        %v1702 = vrot.slane %v1693, %v1701
        %v1703 = vlaneseq
        %v1704 = vshrl.u32 %v1703, 7
        %v1705 = vsub.s32 2, %v1704
        %v1706 = vrot.slane %v1693, %v1705
        %v1707 = vlaneseq
        %v1708 = vshrl.u32 %v1707, 7
        %v1709 = vsub.s32 3, %v1708
        %v1710 = vrot.slane %v1693, %v1709
        %v1711 = vlaneseq
        %v1712 = vshrl.u32 %v1711, 7
        %v1713 = vsub.s32 4, %v1712
        %v1714 = vrot.slane %v1693, %v1713
        %1720 = vmatprep.subr.mxu0 %v1289
        %1721 = vmatpush1.msra.mxu0 %v1288
        %1722 = vmatprep.subr.mxu0 %v1284
        %1723 = vmatpush1.msra.mxu0 %v1283
        %1724 = vmatprep.subr.mxu0 %v1279
        %1725 = vmatpush1.msra.mxu0 %v1278
        %1726 = vmatprep.subr.mxu0 %v1274
        %1727 = vmatpush1.msra.mxu0 %v1273
        %1728 = vmatprep.subr.mxu0 %v1269
        %1729 = vmatpush1.msra.mxu0 %v1268
        %1730 = vmatprep.subr.mxu0 %v1264
        %1731 = vmatpush1.msra.mxu0 %v1263
        %1732 = vmatprep.subr.mxu0 %v1259
        %1733 = vmatpush1.msra.mxu0 %v1258
        %1734 = vmatprep.subr.mxu0 %v1254
        %1735 = vmatpush1.msra.mxu0 %v1253
        %1736 = vmatprep.subr.mxu0 %v1249
        %1737 = vmatpush1.msra.mxu0 %v1248
        %1738 = vmatprep.subr.mxu0 %v1244
        %1739 = vmatpush1.msra.mxu0 %v1243
        %1740 = vmatprep.subr.mxu0 %v1239
        %1741 = vmatpush1.msra.mxu0 %v1238
        %1742 = vmatprep.subr.mxu0 %v1234
        %1743 = vmatpush1.msra.mxu0 %v1233
        %1744 = vmatprep.subr.mxu0 %v1229
        %1745 = vmatpush1.msra.mxu0 %v1228
        %1746 = vmatprep.subr.mxu0 %v1224
        %1747 = vmatpush1.msra.mxu0 %v1223
        %1748 = vmatprep.subr.mxu0 %v1219
        %1749 = vmatpush1.msra.mxu0 %v1218
        %1750 = vmatprep.subr.mxu0 %v1214
        %1751 = vmatpush1.msra.mxu0 %v1213
        %1752 = vmatprep.subr.mxu0 %v1369
        %1753 = vmatpush2.msra.mxu0 %v1368
        %1754 = vmatprep.subr.mxu0 %v1364
        %1755 = vmatpush2.msra.mxu0 %v1363
        %1756 = vmatprep.subr.mxu0 %v1359
        %1757 = vmatpush2.msra.mxu0 %v1358
        %1758 = vmatprep.subr.mxu0 %v1354
        %1759 = vmatpush2.msra.mxu0 %v1353
        %1760 = vmatprep.subr.mxu0 %v1349
        %1761 = vmatpush2.msra.mxu0 %v1348
        %1762 = vmatprep.subr.mxu0 %v1344
        %1763 = vmatpush2.msra.mxu0 %v1343
        %1764 = vmatprep.subr.mxu0 %v1339
        %1765 = vmatpush2.msra.mxu0 %v1338
        %1766 = vmatprep.subr.mxu0 %v1334
        %1767 = vmatpush2.msra.mxu0 %v1333
        %1768 = vmatprep.subr.mxu0 %v1329
        %1769 = vmatpush2.msra.mxu0 %v1328
        %1770 = vmatprep.subr.mxu0 %v1324
        %1771 = vmatpush2.msra.mxu0 %v1323
        %1772 = vmatprep.subr.mxu0 %v1319
        %1773 = vmatpush2.msra.mxu0 %v1318
        %1774 = vmatprep.subr.mxu0 %v1314
        %1775 = vmatpush2.msra.mxu0 %v1313
        %1776 = vmatprep.subr.mxu0 %v1309
        %1777 = vmatpush2.msra.mxu0 %v1308
        %1778 = vmatprep.subr.mxu0 %v1304
        %1779 = vmatpush2.msra.mxu0 %v1303
        %1780 = vmatprep.subr.mxu0 %v1299
        %1781 = vmatpush2.msra.mxu0 %v1298
        %1782 = vmatprep.subr.mxu0 %v1294
        %1783 = vmatpush2.msra.mxu0 %v1293
        %1784 = vmatprep.mubr.f32.mxu0 %v920
        %1785 = vmatmul.mubr.f32.gmra.mxu0 %v919
        %v1786 = vpop.f32.mrf.mxu0
        %v1787 = vadd.f32 %v1698, %v1786
        %v1788 = vpop.f32.mrf.mxu0
        %v1789 = vadd.f32 %v1702, %v1788
        %1790 = vdwg.mxu0
        %1791 = vmatprep.subr.mxu0 %v1449
        %1792 = vmatpush1.msra.mxu0 %v1448
        %1793 = vmatprep.subr.mxu0 %v1444
        %1794 = vmatpush1.msra.mxu0 %v1443
        %1795 = vmatprep.subr.mxu0 %v1439
        %1796 = vmatpush1.msra.mxu0 %v1438
        %1797 = vmatprep.subr.mxu0 %v1434
        %1798 = vmatpush1.msra.mxu0 %v1433
        %1799 = vmatprep.subr.mxu0 %v1429
        %1800 = vmatpush1.msra.mxu0 %v1428
        %1801 = vmatprep.subr.mxu0 %v1424
        %1802 = vmatpush1.msra.mxu0 %v1423
        %1803 = vmatprep.subr.mxu0 %v1419
        %1804 = vmatpush1.msra.mxu0 %v1418
        %1805 = vmatprep.subr.mxu0 %v1414
        %1806 = vmatpush1.msra.mxu0 %v1413
        %1807 = vmatprep.subr.mxu0 %v1409
        %1808 = vmatpush1.msra.mxu0 %v1408
        %1809 = vmatprep.subr.mxu0 %v1404
        %1810 = vmatpush1.msra.mxu0 %v1403
        %1811 = vmatprep.subr.mxu0 %v1399
        %1812 = vmatpush1.msra.mxu0 %v1398
        %1813 = vmatprep.subr.mxu0 %v1394
        %1814 = vmatpush1.msra.mxu0 %v1393
        %1815 = vmatprep.subr.mxu0 %v1389
        %1816 = vmatpush1.msra.mxu0 %v1388
        %1817 = vmatprep.subr.mxu0 %v1384
        %1818 = vmatpush1.msra.mxu0 %v1383
        %1819 = vmatprep.subr.mxu0 %v1379
        %1820 = vmatpush1.msra.mxu0 %v1378
        %1821 = vmatprep.subr.mxu0 %v1374
        %1822 = vmatpush1.msra.mxu0 %v1373
        %1823 = vmatprep.subr.mxu0 %v1529
        %1824 = vmatpush2.msra.mxu0 %v1528
        %1825 = vmatprep.subr.mxu0 %v1524
        %1826 = vmatpush2.msra.mxu0 %v1523
        %1827 = vmatprep.subr.mxu0 %v1519
        %1828 = vmatpush2.msra.mxu0 %v1518
        %1829 = vmatprep.subr.mxu0 %v1514
        %1830 = vmatpush2.msra.mxu0 %v1513
        %1831 = vmatprep.subr.mxu0 %v1509
        %1832 = vmatpush2.msra.mxu0 %v1508
        %1833 = vmatprep.subr.mxu0 %v1504
        %1834 = vmatpush2.msra.mxu0 %v1503
        %1835 = vmatprep.subr.mxu0 %v1499
        %1836 = vmatpush2.msra.mxu0 %v1498
        %1837 = vmatprep.subr.mxu0 %v1494
        %1838 = vmatpush2.msra.mxu0 %v1493
        %1839 = vmatprep.subr.mxu0 %v1489
        %1840 = vmatpush2.msra.mxu0 %v1488
        %1841 = vmatprep.subr.mxu0 %v1484
        %1842 = vmatpush2.msra.mxu0 %v1483
        %1843 = vmatprep.subr.mxu0 %v1479
        %1844 = vmatpush2.msra.mxu0 %v1478
        %1845 = vmatprep.subr.mxu0 %v1474
        %1846 = vmatpush2.msra.mxu0 %v1473
        %1847 = vmatprep.subr.mxu0 %v1469
        %1848 = vmatpush2.msra.mxu0 %v1468
        %1849 = vmatprep.subr.mxu0 %v1464
        %1850 = vmatpush2.msra.mxu0 %v1463
        %1851 = vmatprep.subr.mxu0 %v1459
        %1852 = vmatpush2.msra.mxu0 %v1458
        %1853 = vmatprep.subr.mxu0 %v1454
        %1854 = vmatpush2.msra.mxu0 %v1453
        %1855 = vmatprep.mubr.f32.mxu0 %v922
        %1856 = vmatmul.mubr.f32.gmra.mxu0 %v921
        %v1857 = vpop.f32.mrf.mxu0
        %v1858 = vadd.f32 %v1787, %v1857
        %v1859 = vpop.f32.mrf.mxu0
        %v1860 = vadd.f32 %v1789, %v1859
        %1861 = vdwg.mxu0
        %1862 = vmatprep.subr.mxu0 %v1609
        %1863 = vmatpush1.msra.mxu0 %v1608
        %1864 = vmatprep.subr.mxu0 %v1604
        %1865 = vmatpush1.msra.mxu0 %v1603
        %1866 = vmatprep.subr.mxu0 %v1599
        %1867 = vmatpush1.msra.mxu0 %v1598
        %1868 = vmatprep.subr.mxu0 %v1594
        %1869 = vmatpush1.msra.mxu0 %v1593
        %1870 = vmatprep.subr.mxu0 %v1589
        %1871 = vmatpush1.msra.mxu0 %v1588
        %1872 = vmatprep.subr.mxu0 %v1584
        %1873 = vmatpush1.msra.mxu0 %v1583
        %1874 = vmatprep.subr.mxu0 %v1579
        %1875 = vmatpush1.msra.mxu0 %v1578
        %1876 = vmatprep.subr.mxu0 %v1574
        %1877 = vmatpush1.msra.mxu0 %v1573
        %1878 = vmatprep.subr.mxu0 %v1569
        %1879 = vmatpush1.msra.mxu0 %v1568
        %1880 = vmatprep.subr.mxu0 %v1564
        %1881 = vmatpush1.msra.mxu0 %v1563
        %1882 = vmatprep.subr.mxu0 %v1559
        %1883 = vmatpush1.msra.mxu0 %v1558
        %1884 = vmatprep.subr.mxu0 %v1554
        %1885 = vmatpush1.msra.mxu0 %v1553
        %1886 = vmatprep.subr.mxu0 %v1549
        %1887 = vmatpush1.msra.mxu0 %v1548
        %1888 = vmatprep.subr.mxu0 %v1544
        %1889 = vmatpush1.msra.mxu0 %v1543
        %1890 = vmatprep.subr.mxu0 %v1539
        %1891 = vmatpush1.msra.mxu0 %v1538
        %1892 = vmatprep.subr.mxu0 %v1534
        %1893 = vmatpush1.msra.mxu0 %v1533
        %1894 = vmatprep.subr.mxu0 %v1689
        %1895 = vmatpush2.msra.mxu0 %v1688
        %1896 = vmatprep.subr.mxu0 %v1684
        %1897 = vmatpush2.msra.mxu0 %v1683
        %1898 = vmatprep.subr.mxu0 %v1679
        %1899 = vmatpush2.msra.mxu0 %v1678
        %1900 = vmatprep.subr.mxu0 %v1674
        %1901 = vmatpush2.msra.mxu0 %v1673
        %1902 = vmatprep.subr.mxu0 %v1669
        %1903 = vmatpush2.msra.mxu0 %v1668
        %1904 = vmatprep.subr.mxu0 %v1664
        %1905 = vmatpush2.msra.mxu0 %v1663
        %1906 = vmatprep.subr.mxu0 %v1659
        %1907 = vmatpush2.msra.mxu0 %v1658
        %1908 = vmatprep.subr.mxu0 %v1654
        %1909 = vmatpush2.msra.mxu0 %v1653
        %1910 = vmatprep.subr.mxu0 %v1649
        %1911 = vmatpush2.msra.mxu0 %v1648
        %1912 = vmatprep.subr.mxu0 %v1644
        %1913 = vmatpush2.msra.mxu0 %v1643
        %1914 = vmatprep.subr.mxu0 %v1639
        %1915 = vmatpush2.msra.mxu0 %v1638
        %1916 = vmatprep.subr.mxu0 %v1634
        %1917 = vmatpush2.msra.mxu0 %v1633
        %1918 = vmatprep.subr.mxu0 %v1629
        %1919 = vmatpush2.msra.mxu0 %v1628
        %1920 = vmatprep.subr.mxu0 %v1624
        %1921 = vmatpush2.msra.mxu0 %v1623
        %1922 = vmatprep.subr.mxu0 %v1619
        %1923 = vmatpush2.msra.mxu0 %v1618
        %1924 = vmatprep.subr.mxu0 %v1614
        %1925 = vmatpush2.msra.mxu0 %v1613
        %1926 = vmatprep.mubr.f32.mxu0 %v924
        %1927 = vmatmul.mubr.f32.gmra.mxu0 %v923
        %v1928 = vpop.f32.mrf.mxu0
        %v1929 = vadd.f32 %v1858, %v1928
        %v1930 = vpop.f32.mrf.mxu0
        %v1931 = vadd.f32 %v1860, %v1930
        %1932 = vdwg.mxu0
        %1933 = vmatprep.subr.mxu0 %v1291
        %1934 = vmatpush1.msra.mxu0 %v1290
        %1935 = vmatprep.subr.mxu0 %v1286
        %1936 = vmatpush1.msra.mxu0 %v1285
        %1937 = vmatprep.subr.mxu0 %v1281
        %1938 = vmatpush1.msra.mxu0 %v1280
        %1939 = vmatprep.subr.mxu0 %v1276
        %1940 = vmatpush1.msra.mxu0 %v1275
        %1941 = vmatprep.subr.mxu0 %v1271
        %1942 = vmatpush1.msra.mxu0 %v1270
        %1943 = vmatprep.subr.mxu0 %v1266
        %1944 = vmatpush1.msra.mxu0 %v1265
        %1945 = vmatprep.subr.mxu0 %v1261
        %1946 = vmatpush1.msra.mxu0 %v1260
        %1947 = vmatprep.subr.mxu0 %v1256
        %1948 = vmatpush1.msra.mxu0 %v1255
        %1949 = vmatprep.subr.mxu0 %v1251
        %1950 = vmatpush1.msra.mxu0 %v1250
        %1951 = vmatprep.subr.mxu0 %v1246
        %1952 = vmatpush1.msra.mxu0 %v1245
        %1953 = vmatprep.subr.mxu0 %v1241
        %1954 = vmatpush1.msra.mxu0 %v1240
        %1955 = vmatprep.subr.mxu0 %v1236
        %1956 = vmatpush1.msra.mxu0 %v1235
        %1957 = vmatprep.subr.mxu0 %v1231
        %1958 = vmatpush1.msra.mxu0 %v1230
        %1959 = vmatprep.subr.mxu0 %v1226
        %1960 = vmatpush1.msra.mxu0 %v1225
        %1961 = vmatprep.subr.mxu0 %v1221
        %1962 = vmatpush1.msra.mxu0 %v1220
        %1963 = vmatprep.subr.mxu0 %v1216
        %1964 = vmatpush1.msra.mxu0 %v1215
        %1965 = vmatprep.subr.mxu0 %v1371
        %1966 = vmatpush2.msra.mxu0 %v1370
        %1967 = vmatprep.subr.mxu0 %v1366
        %1968 = vmatpush2.msra.mxu0 %v1365
        %1969 = vmatprep.subr.mxu0 %v1361
        %1970 = vmatpush2.msra.mxu0 %v1360
        %1971 = vmatprep.subr.mxu0 %v1356
        %1972 = vmatpush2.msra.mxu0 %v1355
        %1973 = vmatprep.subr.mxu0 %v1351
        %1974 = vmatpush2.msra.mxu0 %v1350
        %1975 = vmatprep.subr.mxu0 %v1346
        %1976 = vmatpush2.msra.mxu0 %v1345
        %1977 = vmatprep.subr.mxu0 %v1341
        %1978 = vmatpush2.msra.mxu0 %v1340
        %1979 = vmatprep.subr.mxu0 %v1336
        %1980 = vmatpush2.msra.mxu0 %v1335
        %1981 = vmatprep.subr.mxu0 %v1331
        %1982 = vmatpush2.msra.mxu0 %v1330
        %1983 = vmatprep.subr.mxu0 %v1326
        %1984 = vmatpush2.msra.mxu0 %v1325
        %1985 = vmatprep.subr.mxu0 %v1321
        %1986 = vmatpush2.msra.mxu0 %v1320
        %1987 = vmatprep.subr.mxu0 %v1316
        %1988 = vmatpush2.msra.mxu0 %v1315
        %1989 = vmatprep.subr.mxu0 %v1311
        %1990 = vmatpush2.msra.mxu0 %v1310
        %1991 = vmatprep.subr.mxu0 %v1306
        %1992 = vmatpush2.msra.mxu0 %v1305
        %1993 = vmatprep.subr.mxu0 %v1301
        %1994 = vmatpush2.msra.mxu0 %v1300
        %1995 = vmatprep.subr.mxu0 %v1296
        %1996 = vmatpush2.msra.mxu0 %v1295
        %1997 = vmatprep.mubr.f32.mxu0 %v920
        %1998 = vmatmul.mubr.f32.gmra.mxu0 %v919
        %v1999 = vpop.f32.mrf.mxu0
        %v2000 = vadd.f32 %v1706, %v1999
        %v2001 = vpop.f32.mrf.mxu0
        %v2002 = vadd.f32 %v1710, %v2001
        %2003 = vdwg.mxu0
        %2004 = vmatprep.subr.mxu0 %v1451
        %2005 = vmatpush1.msra.mxu0 %v1450
        %2006 = vmatprep.subr.mxu0 %v1446
        %2007 = vmatpush1.msra.mxu0 %v1445
        %2008 = vmatprep.subr.mxu0 %v1441
        %2009 = vmatpush1.msra.mxu0 %v1440
        %2010 = vmatprep.subr.mxu0 %v1436
        %2011 = vmatpush1.msra.mxu0 %v1435
        %2012 = vmatprep.subr.mxu0 %v1431
        %2013 = vmatpush1.msra.mxu0 %v1430
        %2014 = vmatprep.subr.mxu0 %v1426
        %2015 = vmatpush1.msra.mxu0 %v1425
        %2016 = vmatprep.subr.mxu0 %v1421
        %2017 = vmatpush1.msra.mxu0 %v1420
        %2018 = vmatprep.subr.mxu0 %v1416
        %2019 = vmatpush1.msra.mxu0 %v1415
        %2020 = vmatprep.subr.mxu0 %v1411
        %2021 = vmatpush1.msra.mxu0 %v1410
        %2022 = vmatprep.subr.mxu0 %v1406
        %2023 = vmatpush1.msra.mxu0 %v1405
        %2024 = vmatprep.subr.mxu0 %v1401
        %2025 = vmatpush1.msra.mxu0 %v1400
        %2026 = vmatprep.subr.mxu0 %v1396
        %2027 = vmatpush1.msra.mxu0 %v1395
        %2028 = vmatprep.subr.mxu0 %v1391
        %2029 = vmatpush1.msra.mxu0 %v1390
        %2030 = vmatprep.subr.mxu0 %v1386
        %2031 = vmatpush1.msra.mxu0 %v1385
        %2032 = vmatprep.subr.mxu0 %v1381
        %2033 = vmatpush1.msra.mxu0 %v1380
        %2034 = vmatprep.subr.mxu0 %v1376
        %2035 = vmatpush1.msra.mxu0 %v1375
        %2036 = vmatprep.subr.mxu0 %v1531
        %2037 = vmatpush2.msra.mxu0 %v1530
        %2038 = vmatprep.subr.mxu0 %v1526
        %2039 = vmatpush2.msra.mxu0 %v1525
        %2040 = vmatprep.subr.mxu0 %v1521
        %2041 = vmatpush2.msra.mxu0 %v1520
        %2042 = vmatprep.subr.mxu0 %v1516
        %2043 = vmatpush2.msra.mxu0 %v1515
        %2044 = vmatprep.subr.mxu0 %v1511
        %2045 = vmatpush2.msra.mxu0 %v1510
        %2046 = vmatprep.subr.mxu0 %v1506
        %2047 = vmatpush2.msra.mxu0 %v1505
        %2048 = vmatprep.subr.mxu0 %v1501
        %2049 = vmatpush2.msra.mxu0 %v1500
        %2050 = vmatprep.subr.mxu0 %v1496
        %2051 = vmatpush2.msra.mxu0 %v1495
        %2052 = vmatprep.subr.mxu0 %v1491
        %2053 = vmatpush2.msra.mxu0 %v1490
        %2054 = vmatprep.subr.mxu0 %v1486
        %2055 = vmatpush2.msra.mxu0 %v1485
        %2056 = vmatprep.subr.mxu0 %v1481
        %2057 = vmatpush2.msra.mxu0 %v1480
        %2058 = vmatprep.subr.mxu0 %v1476
        %2059 = vmatpush2.msra.mxu0 %v1475
        %2060 = vmatprep.subr.mxu0 %v1471
        %2061 = vmatpush2.msra.mxu0 %v1470
        %2062 = vmatprep.subr.mxu0 %v1466
        %2063 = vmatpush2.msra.mxu0 %v1465
        %2064 = vmatprep.subr.mxu0 %v1461
        %2065 = vmatpush2.msra.mxu0 %v1460
        %2066 = vmatprep.subr.mxu0 %v1456
        %2067 = vmatpush2.msra.mxu0 %v1455
        %2068 = vmatprep.mubr.f32.mxu0 %v922
        %2069 = vmatmul.mubr.f32.gmra.mxu0 %v921
        %v2070 = vpop.f32.mrf.mxu0
        %v2071 = vadd.f32 %v2000, %v2070
        %v2072 = vpop.f32.mrf.mxu0
        %v2073 = vadd.f32 %v2002, %v2072
        %2074 = vdwg.mxu0
        %2075 = vmatprep.subr.mxu0 %v1611
        %2076 = vmatpush1.msra.mxu0 %v1610
        %2077 = vmatprep.subr.mxu0 %v1606
        %2078 = vmatpush1.msra.mxu0 %v1605
        %2079 = vmatprep.subr.mxu0 %v1601
        %2080 = vmatpush1.msra.mxu0 %v1600
        %2081 = vmatprep.subr.mxu0 %v1596
        %2082 = vmatpush1.msra.mxu0 %v1595
        %2083 = vmatprep.subr.mxu0 %v1591
        %2084 = vmatpush1.msra.mxu0 %v1590
        %2085 = vmatprep.subr.mxu0 %v1586
        %2086 = vmatpush1.msra.mxu0 %v1585
        %2087 = vmatprep.subr.mxu0 %v1581
        %2088 = vmatpush1.msra.mxu0 %v1580
        %2089 = vmatprep.subr.mxu0 %v1576
        %2090 = vmatpush1.msra.mxu0 %v1575
        %2091 = vmatprep.subr.mxu0 %v1571
        %2092 = vmatpush1.msra.mxu0 %v1570
        %2093 = vmatprep.subr.mxu0 %v1566
        %2094 = vmatpush1.msra.mxu0 %v1565
        %2095 = vmatprep.subr.mxu0 %v1561
        %2096 = vmatpush1.msra.mxu0 %v1560
        %2097 = vmatprep.subr.mxu0 %v1556
        %2098 = vmatpush1.msra.mxu0 %v1555
        %2099 = vmatprep.subr.mxu0 %v1551
        %2100 = vmatpush1.msra.mxu0 %v1550
        %2101 = vmatprep.subr.mxu0 %v1546
        %2102 = vmatpush1.msra.mxu0 %v1545
        %2103 = vmatprep.subr.mxu0 %v1541
        %2104 = vmatpush1.msra.mxu0 %v1540
        %2105 = vmatprep.subr.mxu0 %v1536
        %2106 = vmatpush1.msra.mxu0 %v1535
        %2107 = vmatprep.subr.mxu0 %v1691
        %2108 = vmatpush2.msra.mxu0 %v1690
        %2109 = vmatprep.subr.mxu0 %v1686
        %2110 = vmatpush2.msra.mxu0 %v1685
        %2111 = vmatprep.subr.mxu0 %v1681
        %2112 = vmatpush2.msra.mxu0 %v1680
        %2113 = vmatprep.subr.mxu0 %v1676
        %2114 = vmatpush2.msra.mxu0 %v1675
        %2115 = vmatprep.subr.mxu0 %v1671
        %2116 = vmatpush2.msra.mxu0 %v1670
        %2117 = vmatprep.subr.mxu0 %v1666
        %2118 = vmatpush2.msra.mxu0 %v1665
        %2119 = vmatprep.subr.mxu0 %v1661
        %2120 = vmatpush2.msra.mxu0 %v1660
        %2121 = vmatprep.subr.mxu0 %v1656
        %2122 = vmatpush2.msra.mxu0 %v1655
        %2123 = vmatprep.subr.mxu0 %v1651
        %2124 = vmatpush2.msra.mxu0 %v1650
        %2125 = vmatprep.subr.mxu0 %v1646
        %2126 = vmatpush2.msra.mxu0 %v1645
        %2127 = vmatprep.subr.mxu0 %v1641
        %2128 = vmatpush2.msra.mxu0 %v1640
        %2129 = vmatprep.subr.mxu0 %v1636
        %2130 = vmatpush2.msra.mxu0 %v1635
        %2131 = vmatprep.subr.mxu0 %v1631
        %2132 = vmatpush2.msra.mxu0 %v1630
        %2133 = vmatprep.subr.mxu0 %v1626
        %2134 = vmatpush2.msra.mxu0 %v1625
        %2135 = vmatprep.subr.mxu0 %v1621
        %2136 = vmatpush2.msra.mxu0 %v1620
        %2137 = vmatprep.subr.mxu0 %v1616
        %2138 = vmatpush2.msra.mxu0 %v1615
        %2139 = vmatprep.mubr.f32.mxu0 %v924
        %2140 = vmatmul.mubr.f32.gmra.mxu0 %v923
        %v2141 = vpop.f32.mrf.mxu0
        %v2142 = vadd.f32 %v2071, %v2141
        %v2143 = vpop.f32.mrf.mxu0
        %v2144 = vadd.f32 %v2073, %v2143
        %2145 = vdwg.mxu0
        %2146 = vmatprep.subr.mxu0 0.0
        %2147 = vmatpush1.msra.mxu0 %v1292
        %2148 = vmatprep.subr.mxu0 0.0
        %2149 = vmatpush1.msra.mxu0 %v1287
        %2150 = vmatprep.subr.mxu0 0.0
        %2151 = vmatpush1.msra.mxu0 %v1282
        %2152 = vmatprep.subr.mxu0 0.0
        %2153 = vmatpush1.msra.mxu0 %v1277
        %2154 = vmatprep.subr.mxu0 0.0
        %2155 = vmatpush1.msra.mxu0 %v1272
        %2156 = vmatprep.subr.mxu0 0.0
        %2157 = vmatpush1.msra.mxu0 %v1267
        %2158 = vmatprep.subr.mxu0 0.0
        %2159 = vmatpush1.msra.mxu0 %v1262
        %2160 = vmatprep.subr.mxu0 0.0
        %2161 = vmatpush1.msra.mxu0 %v1257
        %2162 = vmatprep.subr.mxu0 0.0
        %2163 = vmatpush1.msra.mxu0 %v1252
        %2164 = vmatprep.subr.mxu0 0.0
        %2165 = vmatpush1.msra.mxu0 %v1247
        %2166 = vmatprep.subr.mxu0 0.0
        %2167 = vmatpush1.msra.mxu0 %v1242
        %2168 = vmatprep.subr.mxu0 0.0
        %2169 = vmatpush1.msra.mxu0 %v1237
        %2170 = vmatprep.subr.mxu0 0.0
        %2171 = vmatpush1.msra.mxu0 %v1232
        %2172 = vmatprep.subr.mxu0 0.0
        %2173 = vmatpush1.msra.mxu0 %v1227
        %2174 = vmatprep.subr.mxu0 0.0
        %2175 = vmatpush1.msra.mxu0 %v1222
        %2176 = vmatprep.subr.mxu0 0.0
        %2177 = vmatpush1.msra.mxu0 %v1217
        %2178 = vmatprep.subr.mxu0 0.0
        %2179 = vmatpush2.msra.mxu0 %v1372
        %2180 = vmatprep.subr.mxu0 0.0
        %2181 = vmatpush2.msra.mxu0 %v1367
        %2182 = vmatprep.subr.mxu0 0.0
        %2183 = vmatpush2.msra.mxu0 %v1362
        %2184 = vmatprep.subr.mxu0 0.0
        %2185 = vmatpush2.msra.mxu0 %v1357
        %2186 = vmatprep.subr.mxu0 0.0
        %2187 = vmatpush2.msra.mxu0 %v1352
        %2188 = vmatprep.subr.mxu0 0.0
        %2189 = vmatpush2.msra.mxu0 %v1347
        %2190 = vmatprep.subr.mxu0 0.0
        %2191 = vmatpush2.msra.mxu0 %v1342
        %2192 = vmatprep.subr.mxu0 0.0
        %2193 = vmatpush2.msra.mxu0 %v1337
        %2194 = vmatprep.subr.mxu0 0.0
        %2195 = vmatpush2.msra.mxu0 %v1332
        %2196 = vmatprep.subr.mxu0 0.0
        %2197 = vmatpush2.msra.mxu0 %v1327
        %2198 = vmatprep.subr.mxu0 0.0
        %2199 = vmatpush2.msra.mxu0 %v1322
        %2200 = vmatprep.subr.mxu0 0.0
        %2201 = vmatpush2.msra.mxu0 %v1317
        %2202 = vmatprep.subr.mxu0 0.0
        %2203 = vmatpush2.msra.mxu0 %v1312
        %2204 = vmatprep.subr.mxu0 0.0
        %2205 = vmatpush2.msra.mxu0 %v1307
        %2206 = vmatprep.subr.mxu0 0.0
        %2207 = vmatpush2.msra.mxu0 %v1302
        %2208 = vmatprep.subr.mxu0 0.0
        %2209 = vmatpush2.msra.mxu0 %v1297
        %2210 = vmatprep.mubr.f32.mxu0 %v920
        %2211 = vmatmul.mubr.f32.gmra.mxu0 %v919
        %v2212 = vpop.f32.mrf.mxu0
        %v2213 = vadd.f32 %v1714, %v2212
        %v2214 = vpop.f32.mrf.mxu0
        %2215 = vdwg.mxu0
        %2216 = vmatprep.subr.mxu0 0.0
        %2217 = vmatpush1.msra.mxu0 %v1452
        %2218 = vmatprep.subr.mxu0 0.0
        %2219 = vmatpush1.msra.mxu0 %v1447
        %2220 = vmatprep.subr.mxu0 0.0
        %2221 = vmatpush1.msra.mxu0 %v1442
        %2222 = vmatprep.subr.mxu0 0.0
        %2223 = vmatpush1.msra.mxu0 %v1437
        %2224 = vmatprep.subr.mxu0 0.0
        %2225 = vmatpush1.msra.mxu0 %v1432
        %2226 = vmatprep.subr.mxu0 0.0
        %2227 = vmatpush1.msra.mxu0 %v1427
        %2228 = vmatprep.subr.mxu0 0.0
        %2229 = vmatpush1.msra.mxu0 %v1422
        %2230 = vmatprep.subr.mxu0 0.0
        %2231 = vmatpush1.msra.mxu0 %v1417
        %2232 = vmatprep.subr.mxu0 0.0
        %2233 = vmatpush1.msra.mxu0 %v1412
        %2234 = vmatprep.subr.mxu0 0.0
        %2235 = vmatpush1.msra.mxu0 %v1407
        %2236 = vmatprep.subr.mxu0 0.0
        %2237 = vmatpush1.msra.mxu0 %v1402
        %2238 = vmatprep.subr.mxu0 0.0
        %2239 = vmatpush1.msra.mxu0 %v1397
        %2240 = vmatprep.subr.mxu0 0.0
        %2241 = vmatpush1.msra.mxu0 %v1392
        %2242 = vmatprep.subr.mxu0 0.0
        %2243 = vmatpush1.msra.mxu0 %v1387
        %2244 = vmatprep.subr.mxu0 0.0
        %2245 = vmatpush1.msra.mxu0 %v1382
        %2246 = vmatprep.subr.mxu0 0.0
        %2247 = vmatpush1.msra.mxu0 %v1377
        %2248 = vmatprep.subr.mxu0 0.0
        %2249 = vmatpush2.msra.mxu0 %v1532
        %2250 = vmatprep.subr.mxu0 0.0
        %2251 = vmatpush2.msra.mxu0 %v1527
        %2252 = vmatprep.subr.mxu0 0.0
        %2253 = vmatpush2.msra.mxu0 %v1522
        %2254 = vmatprep.subr.mxu0 0.0
        %2255 = vmatpush2.msra.mxu0 %v1517
        %2256 = vmatprep.subr.mxu0 0.0
        %2257 = vmatpush2.msra.mxu0 %v1512
        %2258 = vmatprep.subr.mxu0 0.0
        %2259 = vmatpush2.msra.mxu0 %v1507
        %2260 = vmatprep.subr.mxu0 0.0
        %2261 = vmatpush2.msra.mxu0 %v1502
        %2262 = vmatprep.subr.mxu0 0.0
        %2263 = vmatpush2.msra.mxu0 %v1497
        %2264 = vmatprep.subr.mxu0 0.0
        %2265 = vmatpush2.msra.mxu0 %v1492
        %2266 = vmatprep.subr.mxu0 0.0
        %2267 = vmatpush2.msra.mxu0 %v1487
        %2268 = vmatprep.subr.mxu0 0.0
        %2269 = vmatpush2.msra.mxu0 %v1482
        %2270 = vmatprep.subr.mxu0 0.0
        %2271 = vmatpush2.msra.mxu0 %v1477
        %2272 = vmatprep.subr.mxu0 0.0
        %2273 = vmatpush2.msra.mxu0 %v1472
        %2274 = vmatprep.subr.mxu0 0.0
        %2275 = vmatpush2.msra.mxu0 %v1467
        %2276 = vmatprep.subr.mxu0 0.0
        %2277 = vmatpush2.msra.mxu0 %v1462
        %2278 = vmatprep.subr.mxu0 0.0
        %2279 = vmatpush2.msra.mxu0 %v1457
        %2280 = vmatprep.mubr.f32.mxu0 %v922
        %2281 = vmatmul.mubr.f32.gmra.mxu0 %v921
        %v2282 = vpop.f32.mrf.mxu0
        %v2283 = vadd.f32 %v2213, %v2282
        %v2284 = vpop.f32.mrf.mxu0
        %2285 = vdwg.mxu0
        %2286 = vmatprep.subr.mxu0 0.0
        %2287 = vmatpush1.msra.mxu0 %v1612
        %2288 = vmatprep.subr.mxu0 0.0
        %2289 = vmatpush1.msra.mxu0 %v1607
        %2290 = vmatprep.subr.mxu0 0.0
        %2291 = vmatpush1.msra.mxu0 %v1602
        %2292 = vmatprep.subr.mxu0 0.0
        %2293 = vmatpush1.msra.mxu0 %v1597
        %2294 = vmatprep.subr.mxu0 0.0
        %2295 = vmatpush1.msra.mxu0 %v1592
        %2296 = vmatprep.subr.mxu0 0.0
        %2297 = vmatpush1.msra.mxu0 %v1587
        %2298 = vmatprep.subr.mxu0 0.0
        %2299 = vmatpush1.msra.mxu0 %v1582
        %2300 = vmatprep.subr.mxu0 0.0
        %2301 = vmatpush1.msra.mxu0 %v1577
        %2302 = vmatprep.subr.mxu0 0.0
        %2303 = vmatpush1.msra.mxu0 %v1572
        %2304 = vmatprep.subr.mxu0 0.0
        %2305 = vmatpush1.msra.mxu0 %v1567
        %2306 = vmatprep.subr.mxu0 0.0
        %2307 = vmatpush1.msra.mxu0 %v1562
        %2308 = vmatprep.subr.mxu0 0.0
        %2309 = vmatpush1.msra.mxu0 %v1557
        %2310 = vmatprep.subr.mxu0 0.0
        %2311 = vmatpush1.msra.mxu0 %v1552
        %2312 = vmatprep.subr.mxu0 0.0
        %2313 = vmatpush1.msra.mxu0 %v1547
        %2314 = vmatprep.subr.mxu0 0.0
        %2315 = vmatpush1.msra.mxu0 %v1542
        %2316 = vmatprep.subr.mxu0 0.0
        %2317 = vmatpush1.msra.mxu0 %v1537
        %2318 = vmatprep.subr.mxu0 0.0
        %2319 = vmatpush2.msra.mxu0 %v1692
        %2320 = vmatprep.subr.mxu0 0.0
        %2321 = vmatpush2.msra.mxu0 %v1687
        %2322 = vmatprep.subr.mxu0 0.0
        %2323 = vmatpush2.msra.mxu0 %v1682
        %2324 = vmatprep.subr.mxu0 0.0
        %2325 = vmatpush2.msra.mxu0 %v1677
        %2326 = vmatprep.subr.mxu0 0.0
        %2327 = vmatpush2.msra.mxu0 %v1672
        %2328 = vmatprep.subr.mxu0 0.0
        %2329 = vmatpush2.msra.mxu0 %v1667
        %2330 = vmatprep.subr.mxu0 0.0
        %2331 = vmatpush2.msra.mxu0 %v1662
        %2332 = vmatprep.subr.mxu0 0.0
        %2333 = vmatpush2.msra.mxu0 %v1657
        %2334 = vmatprep.subr.mxu0 0.0
        %2335 = vmatpush2.msra.mxu0 %v1652
        %2336 = vmatprep.subr.mxu0 0.0
        %2337 = vmatpush2.msra.mxu0 %v1647
        %2338 = vmatprep.subr.mxu0 0.0
        %2339 = vmatpush2.msra.mxu0 %v1642
        %2340 = vmatprep.subr.mxu0 0.0
        %2341 = vmatpush2.msra.mxu0 %v1637
        %2342 = vmatprep.subr.mxu0 0.0
        %2343 = vmatpush2.msra.mxu0 %v1632
        %2344 = vmatprep.subr.mxu0 0.0
        %2345 = vmatpush2.msra.mxu0 %v1627
        %2346 = vmatprep.subr.mxu0 0.0
        %2347 = vmatpush2.msra.mxu0 %v1622
        %2348 = vmatprep.subr.mxu0 0.0
        %2349 = vmatpush2.msra.mxu0 %v1617
        %2350 = vmatprep.mubr.f32.mxu0 %v924
        %2351 = vmatmul.mubr.f32.gmra.mxu0 %v923
        %v2352 = vpop.f32.mrf.mxu0
        %v2353 = vadd.f32 %v2283, %v2352
        %v2354 = vpop.f32.mrf.mxu0
        %2355 = vdwg.mxu0
        %v2356 = vrot.slane %v1929, 4
        %v2357 = vadd.f32 %v1929, %v2356
        %v2358 = vrot.slane %v2357, 2
        %v2359 = vadd.f32 %v2357, %v2358
        %v2360 = vrot.slane %v2359, 1
        %v2361 = vadd.f32 %v2359, %v2360
        %v2362 = vrot.slane %v1931, 4
        %v2363 = vadd.f32 %v1931, %v2362
        %v2364 = vrot.slane %v2363, 2
        %v2365 = vadd.f32 %v2363, %v2364
        %v2366 = vrot.slane %v2365, 1
        %v2367 = vadd.f32 %v2365, %v2366
        %v2368 = vrot.slane %v2142, 4
        %v2369 = vadd.f32 %v2142, %v2368
        %v2370 = vrot.slane %v2369, 2
        %v2371 = vadd.f32 %v2369, %v2370
        %v2372 = vrot.slane %v2371, 1
        %v2373 = vadd.f32 %v2371, %v2372
        %v2374 = vrot.slane %v2144, 4
        %v2375 = vadd.f32 %v2144, %v2374
        %v2376 = vrot.slane %v2375, 2
        %v2377 = vadd.f32 %v2375, %v2376
        %v2378 = vrot.slane %v2377, 1
        %v2379 = vadd.f32 %v2377, %v2378
        %v2380 = vrot.slane %v2353, 4
        %v2381 = vadd.f32 %v2353, %v2380
        %v2382 = vrot.slane %v2381, 2
        %v2383 = vadd.f32 %v2381, %v2382
        %v2384 = vrot.slane %v2383, 1
        %v2385 = vadd.f32 %v2383, %v2384
        %v2386 = vrcp.pop 8.0
        %v2387 = vmul.f32 %v2361, %v2386
        %v2388 = vmul.f32 %v2367, %v2386
        %v2389 = vmul.f32 %v2373, %v2386
        %v2390 = vmul.f32 %v2379, %v2386
        %v2391 = vmul.f32 %v2385, %v2386
        %v2392 = vsub.f32 %v1929, %v2387
        %v2393 = vsub.f32 %v1931, %v2388
        %v2394 = vsub.f32 %v2142, %v2389
        %v2395 = vsub.f32 %v2144, %v2390
        %v2396 = vsub.f32 %v2353, %v2391
        %v2397 = vmul.f32 %v2392, %v2392
        %v2398 = vmul.f32 %v2393, %v2393
        %v2399 = vmul.f32 %v2394, %v2394
        %v2400 = vmul.f32 %v2395, %v2395
        %v2401 = vmul.f32 %v2396, %v2396
        %v2402 = vrot.slane %v2397, 4
        %v2403 = vadd.f32 %v2397, %v2402
        %v2404 = vrot.slane %v2403, 2
        %v2405 = vadd.f32 %v2403, %v2404
        %v2406 = vrot.slane %v2405, 1
        %v2407 = vadd.f32 %v2405, %v2406
        %v2408 = vrot.slane %v2398, 4
        %v2409 = vadd.f32 %v2398, %v2408
        %v2410 = vrot.slane %v2409, 2
        %v2411 = vadd.f32 %v2409, %v2410
        %v2412 = vrot.slane %v2411, 1
        %v2413 = vadd.f32 %v2411, %v2412
        %v2414 = vrot.slane %v2399, 4
        %v2415 = vadd.f32 %v2399, %v2414
        %v2416 = vrot.slane %v2415, 2
        %v2417 = vadd.f32 %v2415, %v2416
        %v2418 = vrot.slane %v2417, 1
        %v2419 = vadd.f32 %v2417, %v2418
        %v2420 = vrot.slane %v2400, 4
        %v2421 = vadd.f32 %v2400, %v2420
        %v2422 = vrot.slane %v2421, 2
        %v2423 = vadd.f32 %v2421, %v2422
        %v2424 = vrot.slane %v2423, 1
        %v2425 = vadd.f32 %v2423, %v2424
        %v2426 = vrot.slane %v2401, 4
        %v2427 = vadd.f32 %v2401, %v2426
        %v2428 = vrot.slane %v2427, 2
        %v2429 = vadd.f32 %v2427, %v2428
        %v2430 = vrot.slane %v2429, 1
        %v2431 = vadd.f32 %v2429, %v2430
        %v2432 = vmul.f32 %v2407, %v2386
        %v2433 = vmul.f32 %v2413, %v2386
        %v2434 = vmul.f32 %v2419, %v2386
        %v2435 = vmul.f32 %v2425, %v2386
        %v2436 = vmul.f32 %v2431, %v2386
        %v2437 = vadd.f32 %v2432, 1e-05
        %v2438 = vadd.f32 %v2433, 1e-05
        %v2439 = vadd.f32 %v2434, 1e-05
        %v2440 = vadd.f32 %v2435, 1e-05
        %v2441 = vadd.f32 %v2436, 1e-05
        %v2442 = vrsqrt.pop %v2437
        %v2443 = vrsqrt.pop %v2438
        %v2444 = vrsqrt.pop %v2439
        %v2445 = vrsqrt.pop %v2440
        %v2446 = vrsqrt.pop %v2441
        %v2447 = vmul.f32 %v2392, %v2442
        %v2448 = vmul.f32 %v2393, %v2443
        %v2449 = vmul.f32 %v2394, %v2444
        %v2450 = vmul.f32 %v2395, %v2445
        %v2451 = vmul.f32 %v2396, %v2446
        %v2452 = vld [vmem:[%s390] sm:$0x1f]
        %v2454 = vlaneseq
        %v2455 = vshrl.u32 %v2454, 7
        %v2456 = vsub.s32 0, %v2455
        %v2457 = vrot.slane %v2452, %v2456
        %v2458 = vlaneseq
        %v2459 = vshrl.u32 %v2458, 7
        %v2460 = vsub.s32 1, %v2459
        %v2461 = vrot.slane %v2452, %v2460
        %v2462 = vlaneseq
        %v2463 = vshrl.u32 %v2462, 7
        %v2464 = vsub.s32 2, %v2463
        %v2465 = vrot.slane %v2452, %v2464
        %v2466 = vlaneseq
        %v2467 = vshrl.u32 %v2466, 7
        %v2468 = vsub.s32 3, %v2467
        %v2469 = vrot.slane %v2452, %v2468
        %v2470 = vlaneseq
        %v2471 = vshrl.u32 %v2470, 7
        %v2472 = vsub.s32 4, %v2471
        %v2473 = vrot.slane %v2452, %v2472
        %v2479 = vmul.f32 %v2447, %v2457
        %v2480 = vmul.f32 %v2448, %v2461
        %v2481 = vmul.f32 %v2449, %v2465
        %v2482 = vmul.f32 %v2450, %v2469
        %v2483 = vmul.f32 %v2451, %v2473
        %v2484 = vld [vmem:[%s399] sm:$0x1f]
        %v2486 = vlaneseq
        %v2487 = vshrl.u32 %v2486, 7
        %v2488 = vsub.s32 0, %v2487
        %v2489 = vrot.slane %v2484, %v2488
        %v2490 = vlaneseq
        %v2491 = vshrl.u32 %v2490, 7
        %v2492 = vsub.s32 1, %v2491
        %v2493 = vrot.slane %v2484, %v2492
        %v2494 = vlaneseq
        %v2495 = vshrl.u32 %v2494, 7
        %v2496 = vsub.s32 2, %v2495
        %v2497 = vrot.slane %v2484, %v2496
        %v2498 = vlaneseq
        %v2499 = vshrl.u32 %v2498, 7
        %v2500 = vsub.s32 3, %v2499
        %v2501 = vrot.slane %v2484, %v2500
        %v2502 = vlaneseq
        %v2503 = vshrl.u32 %v2502, 7
        %v2504 = vsub.s32 4, %v2503
        %v2505 = vrot.slane %v2484, %v2504
        %v2511 = vadd.f32 %v2479, %v2489
        %v2512 = vadd.f32 %v2480, %v2493
        %v2513 = vadd.f32 %v2481, %v2497
        %v2514 = vadd.f32 %v2482, %v2501
        %v2515 = vadd.f32 %v2483, %v2505
        %2516 = vst [vmem:[%s444] sm:$0xff] %v2511
        %2517 = vst [vmem:[%s444 + $0x8] sm:$0xff] %v2512
        %2518 = vst [vmem:[%s444 + $0x10] sm:$0xff] %v2513
        %2519 = vst [vmem:[%s444 + $0x18] sm:$0xff] %v2514
        %2520 = vst [vmem:[%s444 + $0x20] sm:$0xff] %v2515
        %s2521 = sand.u32 %s204, 1
        %s2522 = scalar_lea.sflag [#allocation5], %s2521
        %s2523 = sand.u32 %s204, 1
        %s2524 = smul.addr %s2523, 40
        %s2525 = scalar_lea.vmem [#allocation15], %s2524
        // Predicated region
        $region77: #{tpu_custom_call.1} parent=47 // pred_check
          %p2526 = pneg %p214
        $region78: #{tpu_custom_call.1} parent=47 // pred_check_branch
          %2528 = sbr.rel (%p2526) target = $region80
        $region79: #{tpu_custom_call.1} parent=47 // pred_region
          %s2529 = smul.u32 5, %s29
          %s2531 = ssub.s32 640, 640
          %2532 = vsyncadd %s2522, %s2531
          %s2533 = smul.addr %s2529, 128
          %s2534 = scalar_lea.hbm %s7, %s2533
          %s2536 = sshll.u32 %s2525, 4
          %s2537 = int_to_ptr.vmem [resolvable:$true] %s2536
          %2539 = dma.vmem_to_hbm [thread:$0]  %s2537, 640, %s2534, %s2522
        $region80: #{tpu_custom_call.1} parent=47 // pred_fallthru
          _
      $region48: #{tpu_custom_call.1} parent=5 // pred_fallthru
        _
      %p2540 = scmp.le.s32.totalorder 2, %s24
      // Predicated region
      $region81: #{tpu_custom_call.1} parent=5 // pred_check
        %p2541 = pneg %p2540
      $region82: #{tpu_custom_call.1} parent=5 // pred_check_branch
        %2543 = sbr.rel (%p2541) target = $region84
      $region83: #{tpu_custom_call.1} parent=5 // pred_region
        %s2544 = ssub.s32 %s24, 2
        // Predicated region
        $region85: #{tpu_custom_call.1} parent=83 // pred_check
          %p2545 = pneg %p220
        $region86: #{tpu_custom_call.1} parent=83 // pred_check_branch
          %2547 = sbr.rel (%p2545) target = $region88
        $region87: #{tpu_custom_call.1} parent=83 // pred_region
          %s2548 = sand.u32 %s205, 1
          %s2549 = scalar_lea.sflag [#allocation5], %s2548
          %s2550 = sand.u32 %s205, 1
          %s2551 = smul.addr %s2550, 40
          %s2552 = scalar_lea.vmem [#allocation15], %s2551
          %2553 = dma.done %s2549, 640
        $region88: #{tpu_custom_call.1} parent=83 // pred_fallthru
          _
      $region84: #{tpu_custom_call.1} parent=5 // pred_fallthru
        _
    $region6: #{tpu_custom_call.1} parent=1 // loop_footer
      %s28 = sadd.s32 1, %s24
    $region7: #{tpu_custom_call.1} parent=1 // loop_footer_branch
      %23 = sbr.rel target = $region3
    $region8: #{tpu_custom_call.1} parent=1 // loop_exit
      _
    %2554 = vsyncpa [#allocation4], 1
    %s2555 = scalar_lea.sflag [#allocation4], 1
    %2556 = vsyncpa %s2555, 1
    %2557 = vsyncpa [#allocation7], 1
    %2558 = vsyncpa [#allocation10], 1
    %s2559 = scalar_lea.sflag [#allocation10], 1
    %2560 = vsyncpa %s2559, 1
    %2561 = vsyncpa [#allocation13], 1
    %s2562 = scalar_lea.sflag [#allocation13], 1
    %2563 = vsyncpa %s2562, 1
    %2564 = vsyncpa [#allocation5], 1
    %s2565 = scalar_lea.sflag [#allocation5], 1
    %2566 = vsyncpa %s2565, 1

</llo_original>
